<compile_context>
chip_gen: v6e
topology: v6e:2x2x1
jax: 0.10.0
libtpu: 0.0.40
codegen_flags: <defaults>
</compile_context>

<pallas_src>
import functools
import numpy as np
import jax
import jax.numpy as jnp
from jax.experimental import pallas as pl
from jax.experimental.pallas import tpu as pltpu


# ---------------------------------------------------------------------------
# Fused kernel: encoder (x4, sharing the two GAPs) + MoCLR contrastive head
# ---------------------------------------------------------------------------
def moclr_fused_kernel(x1_ref, x2_ref,
                       w1_ref, b1_ref, w2_ref, b2_ref,
                       w1m_ref, b1m_ref, w2m_ref, b2m_ref,
                       logits_ref, logits_orig_ref,
                       z_scr, pv_scr, pb_scr,
                       *, B, bm, inv_T, pos_momentum_full):
    i = pl.program_id(0)
    n_steps = pl.num_programs(0)

    # ---- encoder stand-in: GAP -> fc1 -> ReLU -> fc2 -> L2 normalize -------
    # GAP reduction stays in f32; only the matmul operands are bf16.
    pooled1 = jnp.mean(x1_ref[...], axis=-1).astype(jnp.bfloat16)   # (bm, C)
    pooled2 = jnp.mean(x2_ref[...], axis=-1).astype(jnp.bfloat16)

    w1, b1, w2, b2 = w1_ref[...], b1_ref[...], w2_ref[...], b2_ref[...]
    w1m, b1m, w2m, b2m = w1m_ref[...], b1m_ref[...], w2m_ref[...], b2m_ref[...]

    def proj_head(pooled_bf16, wa, ba, wb, bb):
        h = jnp.dot(pooled_bf16, wa, preferred_element_type=jnp.float32)
        h = jnp.maximum(h + ba, 0.0)                                 # f32 epilogue
        o = jnp.dot(h.astype(jnp.bfloat16), wb,
                    preferred_element_type=jnp.float32) + bb
        inv_norm = jax.lax.rsqrt(jnp.sum(o * o, axis=-1, keepdims=True) + 1e-12)
        return o * inv_norm                                          # (bm, D) f32

    z1 = proj_head(pooled1, w1, b1, w2, b2)
    z2 = proj_head(pooled2, w1, b1, w2, b2)
    z1m = proj_head(pooled1, w1m, b1m, w2m, b2m)
    z2m = proj_head(pooled2, w1m, b1m, w2m, b2m)

    # ---- stash per-tile results in VMEM scratch (feats order = [z1; z2]) ---
    off = pl.multiple_of(i * bm, bm)
    z_scr[pl.ds(off, bm), :] = z1
    z_scr[pl.ds(off + B, bm), :] = z2

    # Per-row positive dot products (momentum features are consumed here and
    # never stored), all in f32.
    pb = jnp.sum(z1 * z2, axis=-1, keepdims=True)                    # <z1_i, z2_i>
    if pos_momentum_full:
        pv_ij = jnp.sum(z1 * (z2m + z1m), axis=-1, keepdims=True)
        pv_ji = jnp.sum(z2 * (z1m + z2m), axis=-1, keepdims=True)
    else:
        pv_ij = jnp.sum(z1 * z2m, axis=-1, keepdims=True)
        pv_ji = jnp.sum(z2 * z1m, axis=-1, keepdims=True)
    pb_scr[pl.ds(off, bm), :] = pb
    pb_scr[pl.ds(off + B, bm), :] = pb           # diag(sim,+B) == diag(sim,-B)
    pv_scr[pl.ds(off, bm), :] = pv_ij
    pv_scr[pl.ds(off + B, bm), :] = pv_ji

    # ---- contrastive head on the last grid step -----------------------------
    @pl.when(i == n_steps - 1)
    def _head():
        n = 2 * B
        zb = z_scr[...].astype(jnp.bfloat16)                         # (n, D)
        sim = jax.lax.dot_general(                                   # feats @ feats.T
            zb, zb, (((1,), (1,)), ((), ())),
            preferred_element_type=jnp.float32) * inv_T              # (n, n) f32

        pos_base = pb_scr[...] * inv_T                               # (n, 1)
        denom = 3.0 if pos_momentum_full else 2.0
        pos = (pv_scr[...] * inv_T + pos_base) * (1.0 / denom)       # (n, 1)

        # Row i excludes sim columns {i mod B, i mod B + B}.  Build the
        # compacted negative block with three shift-select matmuls
        # (m0[i,k]=sim[i,k], mr[i,k]=sim[i,k-1], ml[i,k]=sim[i,k+1]) and a
        # per-row select keyed on c1 = i mod B.  sim never leaves VMEM.
        row = jax.lax.broadcasted_iota(jnp.int32, (n, n - 1), 0)
        col = jax.lax.broadcasted_iota(jnp.int32, (n, n - 1), 1)
        sel0 = (col == row).astype(jnp.float32)
        selr = (col == row + 1).astype(jnp.float32)
        sell = (col == row - 1).astype(jnp.float32)
        m0 = jnp.dot(sim, sel0, preferred_element_type=jnp.float32)
        mr = jnp.dot(sim, selr, preferred_element_type=jnp.float32)
        ml = jnp.dot(sim, sell, preferred_element_type=jnp.float32)

        c1 = jnp.where(row < B, row, row - B)
        km1 = col - 1
        neg = jnp.where(km1 < c1, mr,
                        jnp.where(km1 < c1 + (B - 1), m0, ml))       # (n, n-1)

        is_pos_col = col == 0
        logits_ref[...] = jnp.where(
            is_pos_col, jnp.broadcast_to(pos, (n, n - 1)), neg)
        logits_orig_ref[...] = jnp.where(
            is_pos_col, jnp.broadcast_to(pos_base, (n, n - 1)), neg)


# ---------------------------------------------------------------------------
# Wrapper: full forward (option = 'contrast')
# ---------------------------------------------------------------------------
def moclr_forward(view_1, view_2, enc_params, mom_params, *,
                  T=0.5, tau=0.99, pos_momentum_full=True, batch_tile=None):
    B, C, H, W = view_1.shape
    HW = H * W
    w1, b1, w2, b2 = enc_params
    w1m, b1m, w2m, b2m = mom_params
    HID = w1.shape[1]
    D = w2.shape[1]
    n = 2 * B

    # Batch tile: largest multiple-of-8 divisor (sublane-aligned scratch
    # writes), capped so the (bm, C, HW) slabs stay a small fraction of VMEM
    # with double-buffering (re-derive the cap for v7x's 64 MiB VMEM).
    if batch_tile is None:
        batch_tile = B
        for cand in (512, 256, 128, 64, 32, 16, 8):
            if B % cand == 0:
                batch_tile = cand
                break
    bm = batch_tile
    assert B % bm == 0, "batch must be divisible by the batch tile"
    assert bm % 8 == 0 or bm == B, "batch tile must be sublane aligned"

    x1 = view_1.reshape(B, C, HW).astype(jnp.float32)
    x2 = view_2.reshape(B, C, HW).astype(jnp.float32)

    # bf16 weights for the MXU; biases / EMA master copies stay f32.
    w1_bf, w2_bf = w1.astype(jnp.bfloat16), w2.astype(jnp.bfloat16)
    w1m_bf, w2m_bf = w1m.astype(jnp.bfloat16), w2m.astype(jnp.bfloat16)

    kern = functools.partial(moclr_fused_kernel, B=B, bm=bm, inv_T=1.0 / T,
                             pos_momentum_full=pos_momentum_full)
    full = lambda i: (0, 0)

    grid_spec = pltpu.PrefetchScalarGridSpec(
        num_scalar_prefetch=0,
        grid=(B // bm,),
        in_specs=[
            pl.BlockSpec((bm, C, HW), lambda i: (i, 0, 0)),
            pl.BlockSpec((bm, C, HW), lambda i: (i, 0, 0)),
            pl.BlockSpec((C, HID), full), pl.BlockSpec((1, HID), full),
            pl.BlockSpec((HID, D), full), pl.BlockSpec((1, D), full),
            pl.BlockSpec((C, HID), full), pl.BlockSpec((1, HID), full),
            pl.BlockSpec((HID, D), full), pl.BlockSpec((1, D), full),
        ],
        out_specs=(
            pl.BlockSpec((n, n - 1), full),
            pl.BlockSpec((n, n - 1), full),
        ),
        scratch_shapes=[
            pltpu.VMEM((n, D), jnp.float32),   # z features [z1; z2]
            pltpu.VMEM((n, 1), jnp.float32),   # per-row momentum positives
            pltpu.VMEM((n, 1), jnp.float32),   # per-row pos_base (pre 1/T)
        ],
    )

    logits, logits_original = pl.pallas_call(
        kern,
        out_shape=(jax.ShapeDtypeStruct((n, n - 1), jnp.float32),
                   jax.ShapeDtypeStruct((n, n - 1), jnp.float32)),
        grid_spec=grid_spec,
        compiler_params=pltpu.CompilerParams(
            # Resident z/pos accumulators force a sequential batch axis; see
            # header comment for the v7x megacore variant.
            dimension_semantics=("arbitrary",),
            vmem_limit_bytes=32 * 1024 * 1024,
        ),
    )(x1, x2, w1_bf, b1, w2_bf, b2, w1m_bf, b1m, w2m_bf, b2m)

    # torch.long -> int64; JAX default int is int32 (x64 disabled).
    labels = jnp.zeros((n,), dtype=jnp.int32)

    # _update_momentum_encoder(): EMA on f32 master params (parameter side
    # effect in PyTorch; returned functionally here, plain JAX glue).
    new_mom_params = tuple(tau * m + (1.0 - tau) * p
                           for p, m in zip(enc_params, mom_params))
    return logits, labels, logits_original, new_mom_params


# ---------------------------------------------------------------------------
# Pure-JAX reference (same bf16 matmul operands as the kernel) for validation
# ---------------------------------------------------------------------------
def moclr_reference(view_1, view_2, enc_params, mom_params, *,
                    T, pos_momentum_full):
    def encode(x, params):
        wa, ba, wb, bb = params
        Bx, C, H, W = x.shape
        pooled = jnp.mean(x.reshape(Bx, C, H * W).astype(jnp.float32), axis=-1)
        h = jnp.dot(pooled.astype(jnp.bfloat16), wa.astype(jnp.bfloat16),
                    preferred_element_type=jnp.float32) + ba
        h = jnp.maximum(h, 0.0)
        o = jnp.dot(h.astype(jnp.bfloat16), wb.astype(jnp.bfloat16),
                    preferred_element_type=jnp.float32) + bb
        return o * jax.lax.rsqrt(jnp.sum(o * o, -1, keepdims=True) + 1e-12)

    z1 = encode(view_1, enc_params)
    z2 = encode(view_2, enc_params)
    z1m = encode(view_1, mom_params)
    z2m = encode(view_2, mom_params)
    B = z1.shape[0]
    n = 2 * B
    feats = jnp.concatenate([z1, z2], axis=0).astype(jnp.bfloat16)
    sim = jnp.dot(feats, feats.T, preferred_element_type=jnp.float32) / T

    neg_idx = np.zeros((n, n - 2), dtype=np.int32)
    for i in range(n):
        excl = {i, (i + B) % n}
        neg_idx[i] = [j for j in range(n) if j not in excl]
    neg = jnp.take_along_axis(sim, jnp.asarray(neg_idx), axis=1)

    pb = jnp.sum(z1 * z2, axis=-1, keepdims=True) / T
    pos_base = jnp.concatenate([pb, pb], axis=0)
    if pos_momentum_full:
        pos_ij = (jnp.sum(z1 * z2m, -1, keepdims=True)
                  + jnp.sum(z1 * z1m, -1, keepdims=True)) / T
        pos_ji = (jnp.sum(z2 * z1m, -1, keepdims=True)
                  + jnp.sum(z2 * z2m, -1, keepdims=True)) / T
        denom = 3.0
    else:
        pos_ij = jnp.sum(z1 * z2m, -1, keepdims=True) / T
        pos_ji = jnp.sum(z2 * z1m, -1, keepdims=True) / T
        denom = 2.0
    pos = (jnp.concatenate([pos_ij, pos_ji], axis=0) + pos_base) / denom
    logits = jnp.concatenate([pos, neg], axis=1)
    logits_original = jnp.concatenate([pos_base, neg], axis=1)
    return logits, logits_original


def init_params(key, C, hidden, D):
    k1, k2, k3, k4 = jax.random.split(key, 4)
    w1 = 0.1 * jax.random.normal(k1, (C, hidden), jnp.float32)
    b1 = 0.01 * jax.random.normal(k2, (1, hidden), jnp.float32)
    w2 = 0.1 * jax.random.normal(k3, (hidden, D), jnp.float32)
    b2 = 0.01 * jax.random.normal(k4, (1, D), jnp.float32)
    return (w1, b1, w2, b2)


if __name__ == "__main__":
    # Small NCHW views; lane-dense projection dims (multiples of 128).
    B, C, H, W = 16, 4, 16, 16
    HIDDEN, D = 128, 128            # proj-head hidden / ssl_feature_dim
    T, TAU = 0.5, 0.99

    key = jax.random.PRNGKey(0)
    k_v1, k_v2, k_enc, k_mom = jax.random.split(key, 4)
    view_1 = jax.random.normal(k_v1, (B, C, H, W), jnp.float32)
    view_2 = jax.random.normal(k_v2, (B, C, H, W), jnp.float32)
    enc_params = init_params(k_enc, C, HIDDEN, D)
    mom_params = init_params(k_mom, C, HIDDEN, D)

    logits, labels, logits_original, new_mom = moclr_forward(
        view_1, view_2, enc_params, mom_params,
        T=T, tau=TAU, pos_momentum_full=True,
        batch_tile=8)               # 2 grid steps at this demo size
    jax.block_until_ready((logits, labels, logits_original, new_mom))

    assert logits.shape == (2 * B, 2 * B - 1)
    assert logits_original.shape == (2 * B, 2 * B - 1)
    assert labels.shape == (2 * B,)

    ref_logits, ref_logits_original = moclr_reference(
        view_1, view_2, enc_params, mom_params,
        T=T, pos_momentum_full=True)
    np.testing.assert_allclose(np.asarray(logits), np.asarray(ref_logits),
                               atol=2e-2, rtol=0)
    np.testing.assert_allclose(np.asarray(logits_original),
                               np.asarray(ref_logits_original),
                               atol=2e-2, rtol=0)
    print("KERNEL_OK")
</pallas_src>

<mosaic_0001>
module attributes {stable_mosaic.version = 11 : i64} {
  func.func @moclr_fused_kernel(%arg0: i32, %arg1: memref<8x4x256xf32, #tpu.memory_space<vmem>>, %arg2: memref<8x4x256xf32, #tpu.memory_space<vmem>>, %arg3: memref<4x128xbf16, #tpu.memory_space<vmem>>, %arg4: memref<1x128xf32, #tpu.memory_space<vmem>>, %arg5: memref<128x128xbf16, #tpu.memory_space<vmem>>, %arg6: memref<1x128xf32, #tpu.memory_space<vmem>>, %arg7: memref<4x128xbf16, #tpu.memory_space<vmem>>, %arg8: memref<1x128xf32, #tpu.memory_space<vmem>>, %arg9: memref<128x128xbf16, #tpu.memory_space<vmem>>, %arg10: memref<1x128xf32, #tpu.memory_space<vmem>>, %arg11: memref<32x31xf32, #tpu.memory_space<vmem>>, %arg12: memref<32x31xf32, #tpu.memory_space<vmem>>, %arg13: memref<32x128xf32, #tpu.memory_space<vmem>>, %arg14: memref<32x1xf32, #tpu.memory_space<vmem>>, %arg15: memref<32x1xf32, #tpu.memory_space<vmem>>) attributes {dimension_semantics = [#tpu.dimension_semantics<arbitrary>], iteration_bounds = array<i64: 2>, scalar_prefetch = 0 : i64, scratch_operands = 3 : i64, tpu.core_type = #tpu.core_type<tc>, window_params = [{transform_indices = @transform_0, window_bounds = array<i64: 8, 4, 256>}, {transform_indices = @transform_1, window_bounds = array<i64: 8, 4, 256>}, {pipeline_mode = #tpu.pipeline_mode<synchronous>, transform_indices = @transform_2, window_bounds = array<i64: 4, 128>}, {pipeline_mode = #tpu.pipeline_mode<synchronous>, transform_indices = @transform_3, window_bounds = array<i64: 1, 128>}, {pipeline_mode = #tpu.pipeline_mode<synchronous>, transform_indices = @transform_4, window_bounds = array<i64: 128, 128>}, {pipeline_mode = #tpu.pipeline_mode<synchronous>, transform_indices = @transform_5, window_bounds = array<i64: 1, 128>}, {pipeline_mode = #tpu.pipeline_mode<synchronous>, transform_indices = @transform_6, window_bounds = array<i64: 4, 128>}, {pipeline_mode = #tpu.pipeline_mode<synchronous>, transform_indices = @transform_7, window_bounds = array<i64: 1, 128>}, {pipeline_mode = #tpu.pipeline_mode<synchronous>, transform_indices = @transform_8, window_bounds = array<i64: 128, 128>}, {pipeline_mode = #tpu.pipeline_mode<synchronous>, transform_indices = @transform_9, window_bounds = array<i64: 1, 128>}, {pipeline_mode = #tpu.pipeline_mode<synchronous>, transform_indices = @transform_10, window_bounds = array<i64: 32, 31>}, {pipeline_mode = #tpu.pipeline_mode<synchronous>, transform_indices = @transform_11, window_bounds = array<i64: 32, 31>}]} {
    %c0 = arith.constant 0 : index
    %c0_0 = arith.constant 0 : index
    %c0_1 = arith.constant 0 : index
    %0 = vector.load %arg1[%c0, %c0_0, %c0_1] : memref<8x4x256xf32, #tpu.memory_space<vmem>>, vector<8x4x256xf32>
    %cst = arith.constant dense<0.000000e+00> : vector<8x4xf32>
    %1 = vector.multi_reduction <add>, %0, %cst [2] : vector<8x4x256xf32> to vector<8x4xf32>
    %cst_2 = arith.constant 2.560000e+02 : f32
    %2 = vector.broadcast %cst_2 : f32 to vector<8x4xf32>
    %3 = arith.divf %1, %2 : vector<8x4xf32>
    %4 = arith.truncf %3 : vector<8x4xf32> to vector<8x4xbf16>
    %c0_3 = arith.constant 0 : index
    %c0_4 = arith.constant 0 : index
    %c0_5 = arith.constant 0 : index
    %5 = vector.load %arg2[%c0_3, %c0_4, %c0_5] : memref<8x4x256xf32, #tpu.memory_space<vmem>>, vector<8x4x256xf32>
    %cst_6 = arith.constant dense<0.000000e+00> : vector<8x4xf32>
    %6 = vector.multi_reduction <add>, %5, %cst_6 [2] : vector<8x4x256xf32> to vector<8x4xf32>
    %cst_7 = arith.constant 2.560000e+02 : f32
    %7 = vector.broadcast %cst_7 : f32 to vector<8x4xf32>
    %8 = arith.divf %6, %7 : vector<8x4xf32>
    %9 = arith.truncf %8 : vector<8x4xf32> to vector<8x4xbf16>
    %c0_8 = arith.constant 0 : index
    %c0_9 = arith.constant 0 : index
    %10 = vector.load %arg3[%c0_8, %c0_9] : memref<4x128xbf16, #tpu.memory_space<vmem>>, vector<4x128xbf16>
    %c0_10 = arith.constant 0 : index
    %c0_11 = arith.constant 0 : index
    %11 = vector.load %arg4[%c0_10, %c0_11] : memref<1x128xf32, #tpu.memory_space<vmem>>, vector<1x128xf32>
    %c0_12 = arith.constant 0 : index
    %c0_13 = arith.constant 0 : index
    %12 = vector.load %arg5[%c0_12, %c0_13] : memref<128x128xbf16, #tpu.memory_space<vmem>>, vector<128x128xbf16>
    %c0_14 = arith.constant 0 : index
    %c0_15 = arith.constant 0 : index
    %13 = vector.load %arg6[%c0_14, %c0_15] : memref<1x128xf32, #tpu.memory_space<vmem>>, vector<1x128xf32>
    %c0_16 = arith.constant 0 : index
    %c0_17 = arith.constant 0 : index
    %14 = vector.load %arg7[%c0_16, %c0_17] : memref<4x128xbf16, #tpu.memory_space<vmem>>, vector<4x128xbf16>
    %c0_18 = arith.constant 0 : index
    %c0_19 = arith.constant 0 : index
    %15 = vector.load %arg8[%c0_18, %c0_19] : memref<1x128xf32, #tpu.memory_space<vmem>>, vector<1x128xf32>
    %c0_20 = arith.constant 0 : index
    %c0_21 = arith.constant 0 : index
    %16 = vector.load %arg9[%c0_20, %c0_21] : memref<128x128xbf16, #tpu.memory_space<vmem>>, vector<128x128xbf16>
    %c0_22 = arith.constant 0 : index
    %c0_23 = arith.constant 0 : index
    %17 = vector.load %arg10[%c0_22, %c0_23] : memref<1x128xf32, #tpu.memory_space<vmem>>, vector<1x128xf32>
    %cst_24 = arith.constant dense<0.000000e+00> : vector<8x128xf32>
    %18 = tpu.matmul %4, %10, %cst_24 {dimension_numbers = #tpu.dot_dimension_numbers<[1], [0], [0], [1], [0, 0, 1, 1], [], []>} : vector<8x4xbf16>, vector<4x128xbf16>, vector<8x128xf32> -> vector<8x128xf32>
    %19 = vector.broadcast %11 : vector<1x128xf32> to vector<8x128xf32>
    %20 = arith.addf %18, %19 : vector<8x128xf32>
    %cst_25 = arith.constant 0.000000e+00 : f32
    %21 = vector.broadcast %cst_25 : f32 to vector<8x128xf32>
    %22 = arith.maximumf %20, %21 : vector<8x128xf32>
    %23 = arith.truncf %22 : vector<8x128xf32> to vector<8x128xbf16>
    %cst_26 = arith.constant dense<0.000000e+00> : vector<8x128xf32>
    %24 = tpu.matmul %23, %12, %cst_26 {dimension_numbers = #tpu.dot_dimension_numbers<[1], [0], [0], [1], [0, 0, 1, 1], [], []>} : vector<8x128xbf16>, vector<128x128xbf16>, vector<8x128xf32> -> vector<8x128xf32>
    %25 = vector.broadcast %13 : vector<1x128xf32> to vector<8x128xf32>
    %26 = arith.addf %24, %25 : vector<8x128xf32>
    %27 = arith.mulf %26, %26 : vector<8x128xf32>
    %cst_27 = arith.constant dense<0.000000e+00> : vector<8xf32>
    %28 = vector.multi_reduction <add>, %27, %cst_27 [1] : vector<8x128xf32> to vector<8xf32>
    %29 = vector.shape_cast %28 : vector<8xf32> to vector<8x1xf32>
    %cst_28 = arith.constant 9.99999996E-13 : f32
    %30 = vector.broadcast %cst_28 : f32 to vector<8x1xf32>
    %31 = arith.addf %29, %30 : vector<8x1xf32>
    %32 = math.rsqrt %31 : vector<8x1xf32>
    %33 = vector.broadcast %32 : vector<8x1xf32> to vector<8x128xf32>
    %34 = arith.mulf %26, %33 : vector<8x128xf32>
    %cst_29 = arith.constant dense<0.000000e+00> : vector<8x128xf32>
    %35 = tpu.matmul %9, %10, %cst_29 {dimension_numbers = #tpu.dot_dimension_numbers<[1], [0], [0], [1], [0, 0, 1, 1], [], []>} : vector<8x4xbf16>, vector<4x128xbf16>, vector<8x128xf32> -> vector<8x128xf32>
    %36 = vector.broadcast %11 : vector<1x128xf32> to vector<8x128xf32>
    %37 = arith.addf %35, %36 : vector<8x128xf32>
    %cst_30 = arith.constant 0.000000e+00 : f32
    %38 = vector.broadcast %cst_30 : f32 to vector<8x128xf32>
    %39 = arith.maximumf %37, %38 : vector<8x128xf32>
    %40 = arith.truncf %39 : vector<8x128xf32> to vector<8x128xbf16>
    %cst_31 = arith.constant dense<0.000000e+00> : vector<8x128xf32>
    %41 = tpu.matmul %40, %12, %cst_31 {dimension_numbers = #tpu.dot_dimension_numbers<[1], [0], [0], [1], [0, 0, 1, 1], [], []>} : vector<8x128xbf16>, vector<128x128xbf16>, vector<8x128xf32> -> vector<8x128xf32>
    %42 = vector.broadcast %13 : vector<1x128xf32> to vector<8x128xf32>
    %43 = arith.addf %41, %42 : vector<8x128xf32>
    %44 = arith.mulf %43, %43 : vector<8x128xf32>
    %cst_32 = arith.constant dense<0.000000e+00> : vector<8xf32>
    %45 = vector.multi_reduction <add>, %44, %cst_32 [1] : vector<8x128xf32> to vector<8xf32>
    %46 = vector.shape_cast %45 : vector<8xf32> to vector<8x1xf32>
    %cst_33 = arith.constant 9.99999996E-13 : f32
    %47 = vector.broadcast %cst_33 : f32 to vector<8x1xf32>
    %48 = arith.addf %46, %47 : vector<8x1xf32>
    %49 = math.rsqrt %48 : vector<8x1xf32>
    %50 = vector.broadcast %49 : vector<8x1xf32> to vector<8x128xf32>
    %51 = arith.mulf %43, %50 : vector<8x128xf32>
    %cst_34 = arith.constant dense<0.000000e+00> : vector<8x128xf32>
    %52 = tpu.matmul %4, %14, %cst_34 {dimension_numbers = #tpu.dot_dimension_numbers<[1], [0], [0], [1], [0, 0, 1, 1], [], []>} : vector<8x4xbf16>, vector<4x128xbf16>, vector<8x128xf32> -> vector<8x128xf32>
    %53 = vector.broadcast %15 : vector<1x128xf32> to vector<8x128xf32>
    %54 = arith.addf %52, %53 : vector<8x128xf32>
    %cst_35 = arith.constant 0.000000e+00 : f32
    %55 = vector.broadcast %cst_35 : f32 to vector<8x128xf32>
    %56 = arith.maximumf %54, %55 : vector<8x128xf32>
    %57 = arith.truncf %56 : vector<8x128xf32> to vector<8x128xbf16>
    %cst_36 = arith.constant dense<0.000000e+00> : vector<8x128xf32>
    %58 = tpu.matmul %57, %16, %cst_36 {dimension_numbers = #tpu.dot_dimension_numbers<[1], [0], [0], [1], [0, 0, 1, 1], [], []>} : vector<8x128xbf16>, vector<128x128xbf16>, vector<8x128xf32> -> vector<8x128xf32>
    %59 = vector.broadcast %17 : vector<1x128xf32> to vector<8x128xf32>
    %60 = arith.addf %58, %59 : vector<8x128xf32>
    %61 = arith.mulf %60, %60 : vector<8x128xf32>
    %cst_37 = arith.constant dense<0.000000e+00> : vector<8xf32>
    %62 = vector.multi_reduction <add>, %61, %cst_37 [1] : vector<8x128xf32> to vector<8xf32>
    %63 = vector.shape_cast %62 : vector<8xf32> to vector<8x1xf32>
    %cst_38 = arith.constant 9.99999996E-13 : f32
    %64 = vector.broadcast %cst_38 : f32 to vector<8x1xf32>
    %65 = arith.addf %63, %64 : vector<8x1xf32>
    %66 = math.rsqrt %65 : vector<8x1xf32>
    %67 = vector.broadcast %66 : vector<8x1xf32> to vector<8x128xf32>
    %68 = arith.mulf %60, %67 : vector<8x128xf32>
    %cst_39 = arith.constant dense<0.000000e+00> : vector<8x128xf32>
    %69 = tpu.matmul %9, %14, %cst_39 {dimension_numbers = #tpu.dot_dimension_numbers<[1], [0], [0], [1], [0, 0, 1, 1], [], []>} : vector<8x4xbf16>, vector<4x128xbf16>, vector<8x128xf32> -> vector<8x128xf32>
    %70 = vector.broadcast %15 : vector<1x128xf32> to vector<8x128xf32>
    %71 = arith.addf %69, %70 : vector<8x128xf32>
    %cst_40 = arith.constant 0.000000e+00 : f32
    %72 = vector.broadcast %cst_40 : f32 to vector<8x128xf32>
    %73 = arith.maximumf %71, %72 : vector<8x128xf32>
    %74 = arith.truncf %73 : vector<8x128xf32> to vector<8x128xbf16>
    %cst_41 = arith.constant dense<0.000000e+00> : vector<8x128xf32>
    %75 = tpu.matmul %74, %16, %cst_41 {dimension_numbers = #tpu.dot_dimension_numbers<[1], [0], [0], [1], [0, 0, 1, 1], [], []>} : vector<8x128xbf16>, vector<128x128xbf16>, vector<8x128xf32> -> vector<8x128xf32>
    %76 = vector.broadcast %17 : vector<1x128xf32> to vector<8x128xf32>
    %77 = arith.addf %75, %76 : vector<8x128xf32>
    %78 = arith.mulf %77, %77 : vector<8x128xf32>
    %cst_42 = arith.constant dense<0.000000e+00> : vector<8xf32>
    %79 = vector.multi_reduction <add>, %78, %cst_42 [1] : vector<8x128xf32> to vector<8xf32>
    %80 = vector.shape_cast %79 : vector<8xf32> to vector<8x1xf32>
    %cst_43 = arith.constant 9.99999996E-13 : f32
    %81 = vector.broadcast %cst_43 : f32 to vector<8x1xf32>
    %82 = arith.addf %80, %81 : vector<8x1xf32>
    %83 = math.rsqrt %82 : vector<8x1xf32>
    %84 = vector.broadcast %83 : vector<8x1xf32> to vector<8x128xf32>
    %85 = arith.mulf %77, %84 : vector<8x128xf32>
    %c8_i32 = arith.constant 8 : i32
    %86 = arith.muli %arg0, %c8_i32 : i32
    %87 = tpu.assume_multiple %86, 8 : i32
    %88 = arith.index_cast %87 : i32 to index
    %c0_44 = arith.constant 0 : index
    %89 = vector.load %arg13[%88, %c0_44] : memref<32x128xf32, #tpu.memory_space<vmem>>, vector<8x128xf32>
    tpu.vector_store %arg13[%88, %c0_44], %34 {strides = array<i32>} : memref<32x128xf32, #tpu.memory_space<vmem>>, vector<8x128xf32>,
    %c16_i32 = arith.constant 16 : i32
    %90 = arith.addi %87, %c16_i32 : i32
    %91 = arith.index_cast %90 : i32 to index
    %c0_45 = arith.constant 0 : index
    %92 = vector.load %arg13[%91, %c0_45] : memref<32x128xf32, #tpu.memory_space<vmem>>, vector<8x128xf32>
    tpu.vector_store %arg13[%91, %c0_45], %51 {strides = array<i32>} : memref<32x128xf32, #tpu.memory_space<vmem>>, vector<8x128xf32>,
    %93 = arith.mulf %34, %51 : vector<8x128xf32>
    %cst_46 = arith.constant dense<0.000000e+00> : vector<8xf32>
    %94 = vector.multi_reduction <add>, %93, %cst_46 [1] : vector<8x128xf32> to vector<8xf32>
    %95 = vector.shape_cast %94 : vector<8xf32> to vector<8x1xf32>
    %96 = arith.addf %85, %68 : vector<8x128xf32>
    %97 = arith.mulf %34, %96 : vector<8x128xf32>
    %cst_47 = arith.constant dense<0.000000e+00> : vector<8xf32>
    %98 = vector.multi_reduction <add>, %97, %cst_47 [1] : vector<8x128xf32> to vector<8xf32>
    %99 = vector.shape_cast %98 : vector<8xf32> to vector<8x1xf32>
    %100 = arith.addf %68, %85 : vector<8x128xf32>
    %101 = arith.mulf %51, %100 : vector<8x128xf32>
    %cst_48 = arith.constant dense<0.000000e+00> : vector<8xf32>
    %102 = vector.multi_reduction <add>, %101, %cst_48 [1] : vector<8x128xf32> to vector<8xf32>
    %103 = vector.shape_cast %102 : vector<8xf32> to vector<8x1xf32>
    %104 = arith.index_cast %87 : i32 to index
    %c0_49 = arith.constant 0 : index
    %105 = vector.load %arg15[%104, %c0_49] : memref<32x1xf32, #tpu.memory_space<vmem>>, vector<8x1xf32>
    tpu.vector_store %arg15[%104, %c0_49], %95 {strides = array<i32>} : memref<32x1xf32, #tpu.memory_space<vmem>>, vector<8x1xf32>,
    %c16_i32_50 = arith.constant 16 : i32
    %106 = arith.addi %87, %c16_i32_50 : i32
    %107 = arith.index_cast %106 : i32 to index
    %c0_51 = arith.constant 0 : index
    %108 = vector.load %arg15[%107, %c0_51] : memref<32x1xf32, #tpu.memory_space<vmem>>, vector<8x1xf32>
    tpu.vector_store %arg15[%107, %c0_51], %95 {strides = array<i32>} : memref<32x1xf32, #tpu.memory_space<vmem>>, vector<8x1xf32>,
    %109 = arith.index_cast %87 : i32 to index
    %c0_52 = arith.constant 0 : index
    %110 = vector.load %arg14[%109, %c0_52] : memref<32x1xf32, #tpu.memory_space<vmem>>, vector<8x1xf32>
    tpu.vector_store %arg14[%109, %c0_52], %99 {strides = array<i32>} : memref<32x1xf32, #tpu.memory_space<vmem>>, vector<8x1xf32>,
    %c16_i32_53 = arith.constant 16 : i32
    %111 = arith.addi %87, %c16_i32_53 : i32
    %112 = arith.index_cast %111 : i32 to index
    %c0_54 = arith.constant 0 : index
    %113 = vector.load %arg14[%112, %c0_54] : memref<32x1xf32, #tpu.memory_space<vmem>>, vector<8x1xf32>
    tpu.vector_store %arg14[%112, %c0_54], %103 {strides = array<i32>} : memref<32x1xf32, #tpu.memory_space<vmem>>, vector<8x1xf32>,
    %c1_i32 = arith.constant 1 : i32
    %114 = arith.cmpi eq, %arg0, %c1_i32 : i32
    %115 = arith.extui %114 : i1 to i32
    %c0_i32 = arith.constant 0 : i32
    %116 = arith.cmpi ne, %115, %c0_i32 : i32
    scf.if %116 {
      %c0_55 = arith.constant 0 : index
      %c0_56 = arith.constant 0 : index
      %117 = vector.load %arg13[%c0_55, %c0_56] : memref<32x128xf32, #tpu.memory_space<vmem>>, vector<32x128xf32>
      %118 = arith.truncf %117 : vector<32x128xf32> to vector<32x128xbf16>
      %cst_57 = arith.constant dense<0.000000e+00> : vector<32x32xf32>
      %119 = tpu.matmul %118, %118, %cst_57 {dimension_numbers = #tpu.dot_dimension_numbers<[1], [1], [0], [0], [0, 0, 1, 0], [], []>} : vector<32x128xbf16>, vector<32x128xbf16>, vector<32x32xf32> -> vector<32x32xf32>
      %cst_58 = arith.constant 2.000000e+00 : f32
      %120 = vector.broadcast %cst_58 : f32 to vector<32x32xf32>
      %121 = arith.mulf %119, %120 : vector<32x32xf32>
      %c0_59 = arith.constant 0 : index
      %c0_60 = arith.constant 0 : index
      %122 = vector.load %arg15[%c0_59, %c0_60] : memref<32x1xf32, #tpu.memory_space<vmem>>, vector<32x1xf32>
      %cst_61 = arith.constant 2.000000e+00 : f32
      %123 = vector.broadcast %cst_61 : f32 to vector<32x1xf32>
      %124 = arith.mulf %122, %123 : vector<32x1xf32>
      %c0_62 = arith.constant 0 : index
      %c0_63 = arith.constant 0 : index
      %125 = vector.load %arg14[%c0_62, %c0_63] : memref<32x1xf32, #tpu.memory_space<vmem>>, vector<32x1xf32>
      %cst_64 = arith.constant 2.000000e+00 : f32
      %126 = vector.broadcast %cst_64 : f32 to vector<32x1xf32>
      %127 = arith.mulf %125, %126 : vector<32x1xf32>
      %128 = arith.addf %127, %124 : vector<32x1xf32>
      %cst_65 = arith.constant 0.333333343 : f32
      %129 = vector.broadcast %cst_65 : f32 to vector<32x1xf32>
      %130 = arith.mulf %128, %129 : vector<32x1xf32>
      %131 = tpu.iota {dimensions = array<i32: 0>} : vector<32x31xi32>
      %132 = tpu.iota {dimensions = array<i32: 1>} : vector<32x31xi32>
      %133 = arith.cmpi eq, %132, %131 : vector<32x31xi32>
      %134 = arith.extui %133 : vector<32x31xi1> to vector<32x31xi32>
      %135 = arith.sitofp %134 : vector<32x31xi32> to vector<32x31xf32>
      %c1_i32_66 = arith.constant 1 : i32
      %136 = vector.broadcast %c1_i32_66 : i32 to vector<32x31xi32>
      %137 = arith.addi %131, %136 : vector<32x31xi32>
      %138 = arith.cmpi eq, %132, %137 : vector<32x31xi32>
      %139 = arith.extui %138 : vector<32x31xi1> to vector<32x31xi32>
      %140 = arith.sitofp %139 : vector<32x31xi32> to vector<32x31xf32>
      %c1_i32_67 = arith.constant 1 : i32
      %141 = vector.broadcast %c1_i32_67 : i32 to vector<32x31xi32>
      %142 = arith.subi %131, %141 : vector<32x31xi32>
      %143 = arith.cmpi eq, %132, %142 : vector<32x31xi32>
      %144 = arith.extui %143 : vector<32x31xi1> to vector<32x31xi32>
      %145 = arith.sitofp %144 : vector<32x31xi32> to vector<32x31xf32>
      %cst_68 = arith.constant dense<0.000000e+00> : vector<32x31xf32>
      %146 = tpu.matmul %121, %135, %cst_68 {dimension_numbers = #tpu.dot_dimension_numbers<[1], [0], [0], [1], [0, 0, 1, 1], [], []>} : vector<32x32xf32>, vector<32x31xf32>, vector<32x31xf32> -> vector<32x31xf32>
      %cst_69 = arith.constant dense<0.000000e+00> : vector<32x31xf32>
      %147 = tpu.matmul %121, %140, %cst_69 {dimension_numbers = #tpu.dot_dimension_numbers<[1], [0], [0], [1], [0, 0, 1, 1], [], []>} : vector<32x32xf32>, vector<32x31xf32>, vector<32x31xf32> -> vector<32x31xf32>
      %cst_70 = arith.constant dense<0.000000e+00> : vector<32x31xf32>
      %148 = tpu.matmul %121, %145, %cst_70 {dimension_numbers = #tpu.dot_dimension_numbers<[1], [0], [0], [1], [0, 0, 1, 1], [], []>} : vector<32x32xf32>, vector<32x31xf32>, vector<32x31xf32> -> vector<32x31xf32>
      %c16_i32_71 = arith.constant 16 : i32
      %149 = vector.broadcast %c16_i32_71 : i32 to vector<32x31xi32>
      %150 = arith.cmpi slt, %131, %149 : vector<32x31xi32>
      %c16_i32_72 = arith.constant 16 : i32
      %151 = vector.broadcast %c16_i32_72 : i32 to vector<32x31xi32>
      %152 = arith.subi %131, %151 : vector<32x31xi32>
      %153 = arith.select %150, %131, %152 : vector<32x31xi1>, vector<32x31xi32>
      %c1_i32_73 = arith.constant 1 : i32
      %154 = vector.broadcast %c1_i32_73 : i32 to vector<32x31xi32>
      %155 = arith.subi %132, %154 : vector<32x31xi32>
      %156 = arith.cmpi slt, %155, %153 : vector<32x31xi32>
      %c15_i32 = arith.constant 15 : i32
      %157 = vector.broadcast %c15_i32 : i32 to vector<32x31xi32>
      %158 = arith.addi %153, %157 : vector<32x31xi32>
      %159 = arith.cmpi slt, %155, %158 : vector<32x31xi32>
      %160 = arith.select %159, %146, %148 : vector<32x31xi1>, vector<32x31xf32>
      %161 = arith.select %156, %147, %160 : vector<32x31xi1>, vector<32x31xf32>
      %c0_i32_74 = arith.constant 0 : i32
      %162 = vector.broadcast %c0_i32_74 : i32 to vector<32x31xi32>
      %163 = arith.cmpi eq, %132, %162 : vector<32x31xi32>
      %164 = vector.shape_cast %130 : vector<32x1xf32> to vector<32x1xf32>
      %165 = vector.broadcast %164 : vector<32x1xf32> to vector<32x31xf32>
      %166 = arith.select %163, %165, %161 : vector<32x31xi1>, vector<32x31xf32>
      %c0_75 = arith.constant 0 : index
      %c0_76 = arith.constant 0 : index
      %167 = vector.load %arg11[%c0_75, %c0_76] : memref<32x31xf32, #tpu.memory_space<vmem>>, vector<32x31xf32>
      tpu.vector_store %arg11[%c0_75, %c0_76], %166 {strides = array<i32>} : memref<32x31xf32, #tpu.memory_space<vmem>>, vector<32x31xf32>,
      %168 = vector.shape_cast %124 : vector<32x1xf32> to vector<32x1xf32>
      %169 = vector.broadcast %168 : vector<32x1xf32> to vector<32x31xf32>
      %170 = arith.select %163, %169, %161 : vector<32x31xi1>, vector<32x31xf32>
      %c0_77 = arith.constant 0 : index
      %c0_78 = arith.constant 0 : index
      %171 = vector.load %arg12[%c0_77, %c0_78] : memref<32x31xf32, #tpu.memory_space<vmem>>, vector<32x31xf32>
      tpu.vector_store %arg12[%c0_77, %c0_78], %170 {strides = array<i32>} : memref<32x31xf32, #tpu.memory_space<vmem>>, vector<32x31xf32>,
    } else {
    }
    return
  }
  func.func @transform_0(%arg0: i32) -> (i32, i32, i32) {
    %c0_i32 = arith.constant 0 : i32
    %c0_i32_0 = arith.constant 0 : i32
    %c0_i32_1 = arith.constant 0 : i32
    return %arg0, %c0_i32, %c0_i32_0 : i32, i32, i32
  }
  func.func @transform_1(%arg0: i32) -> (i32, i32, i32) {
    %c0_i32 = arith.constant 0 : i32
    %c0_i32_0 = arith.constant 0 : i32
    %c0_i32_1 = arith.constant 0 : i32
    return %arg0, %c0_i32, %c0_i32_0 : i32, i32, i32
  }
  func.func @transform_2(%arg0: i32) -> (i32, i32) {
    %c0_i32 = arith.constant 0 : i32
    %c0_i32_0 = arith.constant 0 : i32
    %c0_i32_1 = arith.constant 0 : i32
    return %c0_i32, %c0_i32_0 : i32, i32
  }
  func.func @transform_3(%arg0: i32) -> (i32, i32) {
    %c0_i32 = arith.constant 0 : i32
    %c0_i32_0 = arith.constant 0 : i32
    %c0_i32_1 = arith.constant 0 : i32
    return %c0_i32, %c0_i32_0 : i32, i32
  }
  func.func @transform_4(%arg0: i32) -> (i32, i32) {
    %c0_i32 = arith.constant 0 : i32
    %c0_i32_0 = arith.constant 0 : i32
    %c0_i32_1 = arith.constant 0 : i32
    return %c0_i32, %c0_i32_0 : i32, i32
  }
  func.func @transform_5(%arg0: i32) -> (i32, i32) {
    %c0_i32 = arith.constant 0 : i32
    %c0_i32_0 = arith.constant 0 : i32
    %c0_i32_1 = arith.constant 0 : i32
    return %c0_i32, %c0_i32_0 : i32, i32
  }
  func.func @transform_6(%arg0: i32) -> (i32, i32) {
    %c0_i32 = arith.constant 0 : i32
    %c0_i32_0 = arith.constant 0 : i32
    %c0_i32_1 = arith.constant 0 : i32
    return %c0_i32, %c0_i32_0 : i32, i32
  }
  func.func @transform_7(%arg0: i32) -> (i32, i32) {
    %c0_i32 = arith.constant 0 : i32
    %c0_i32_0 = arith.constant 0 : i32
    %c0_i32_1 = arith.constant 0 : i32
    return %c0_i32, %c0_i32_0 : i32, i32
  }
  func.func @transform_8(%arg0: i32) -> (i32, i32) {
    %c0_i32 = arith.constant 0 : i32
    %c0_i32_0 = arith.constant 0 : i32
    %c0_i32_1 = arith.constant 0 : i32
    return %c0_i32, %c0_i32_0 : i32, i32
  }
  func.func @transform_9(%arg0: i32) -> (i32, i32) {
    %c0_i32 = arith.constant 0 : i32
    %c0_i32_0 = arith.constant 0 : i32
    %c0_i32_1 = arith.constant 0 : i32
    return %c0_i32, %c0_i32_0 : i32, i32
  }
  func.func @transform_10(%arg0: i32) -> (i32, i32) {
    %c0_i32 = arith.constant 0 : i32
    %c0_i32_0 = arith.constant 0 : i32
    %c0_i32_1 = arith.constant 0 : i32
    return %c0_i32, %c0_i32_0 : i32, i32
  }
  func.func @transform_11(%arg0: i32) -> (i32, i32) {
    %c0_i32 = arith.constant 0 : i32
    %c0_i32_0 = arith.constant 0 : i32
    %c0_i32_1 = arith.constant 0 : i32
    return %c0_i32, %c0_i32_0 : i32, i32
  }
}

</mosaic_0001>

<llo_original>
// kernel: tpu_custom_call.1
$region0: #{tpu_custom_call.1}
  #allocation0 [shape = 'u32[]', space=smem, size = 0x4, offset = 0x4, fixed_abs, tag = 'smem constant byte address 0x4 - core index']
  #allocation1 [shape = 'u32[144,128]{1,0:T(1,128)}', space=vmem, size = 0x12000, scoped, tag = 'internal scratch']
  #allocation2 [shape = 'f32[32,128]{1,0:T(8,128)}', space=vmem, size = 0x4000, scoped, tag = 'scratch operand']
  #allocation3 [shape = 'f32[32,1]{1,0:T(8,128)}', space=vmem, size = 0x4000, scoped, tag = 'scratch operand']
  #allocation4 [shape = 'f32[32,1]{1,0:T(8,128)}', space=vmem, size = 0x4000, scoped, tag = 'scratch operand']
  %s0 = inlined_call_operand.hbm [shape: f32[16,4,256], index: 0, kind: input, shape index: {}]
  %s1 = inlined_call_operand.hbm [shape: f32[16,4,256], index: 1, kind: input, shape index: {}]
  %s2 = inlined_call_operand.vmem [shape: bf16[4,128], index: 2, kind: input, shape index: {}]
  %s3 = inlined_call_operand.vmem [shape: f32[1,128], index: 3, kind: input, shape index: {}]
  %s4 = inlined_call_operand.hbm [shape: bf16[128,128], index: 4, kind: input, shape index: {}]
  %s5 = inlined_call_operand.vmem [shape: f32[1,128], index: 5, kind: input, shape index: {}]
  %s6 = inlined_call_operand.vmem [shape: bf16[4,128], index: 6, kind: input, shape index: {}]
  %s7 = inlined_call_operand.vmem [shape: f32[1,128], index: 7, kind: input, shape index: {}]
  %s8 = inlined_call_operand.hbm [shape: bf16[128,128], index: 8, kind: input, shape index: {}]
  %s9 = inlined_call_operand.vmem [shape: f32[1,128], index: 9, kind: input, shape index: {}]
  %s10 = inlined_call_operand.hbm [shape: f32[32,31], index: 10, kind: output, shape index: {0}]
  %s11 = inlined_call_operand.hbm [shape: f32[32,31], index: 11, kind: output, shape index: {1}]
  %12 = xla_tuple %s10, %s11
  %s13 = sld [smem:[#allocation0]]
  $region101: #{tpu_custom_call.1} parent=0
    _
  %s15 = ssub.s32 1, %s13
  %s16 = scalar_select 0, %s15, %s13
  $region1: #{tpu_custom_call.1} parent=0
    #allocation5 [shape = 'u8[65536]{0}', space=vmem, size = 0x10000, scoped, tag = 'input window, operand 0']
    #allocation6 [shape = 's32[2]{0}', space=sflag, size = 0x8, scoped, tag = 'scoped memory for tpu_custom_call.1']
    #allocation7 [shape = 's32[2]{0}', space=sflag, size = 0x8, scoped, tag = 'scoped memory for tpu_custom_call.1']
    #allocation8 [shape = 'u8[65536]{0}', space=vmem, size = 0x10000, scoped, tag = 'input window, operand 1']
    #allocation9 [shape = 's32[2]{0}', space=sflag, size = 0x8, scoped, tag = 'scoped memory for tpu_custom_call.1']
    #allocation10 [shape = 'u8[32768]{0}', space=vmem, size = 0x8000, scoped, tag = 'input window, operand 4, single buffered']
    #allocation11 [shape = 'u8[32768]{0}', space=vmem, size = 0x8000, scoped, tag = 'input window, operand 8, single buffered']
    #allocation12 [shape = 's32[1]{0}', space=sflag, size = 0x4, scoped, tag = 'scoped memory for tpu_custom_call.1']
    #allocation13 [shape = 'u8[16384]{0}', space=vmem, size = 0x4000, scoped, tag = 'output window, operand 0, single buffered']
    #allocation14 [shape = 'u8[16384]{0}', space=vmem, size = 0x4000, scoped, tag = 'output window, operand 1, single buffered']
    #allocation15 [shape = 's32[1]{0}', space=sflag, size = 0x4, scoped, tag = 'scoped memory for tpu_custom_call.1']
    %17 = vsyncpa [#allocation6], 0
    %s18 = scalar_lea.sflag [#allocation6], 1
    %19 = vsyncpa %s18, 0
    %20 = vsyncpa [#allocation9], 0
    %s21 = scalar_lea.sflag [#allocation9], 1
    %22 = vsyncpa %s21, 0
    %23 = vsyncpa [#allocation12], 0
    %24 = vsyncpa [#allocation7], 0
    %25 = vsyncpa [#allocation15], 0
    loop: start=0, step=1, limit=4
    $region2: #{tpu_custom_call.1} parent=1 // loop_pre_header
      _
    $region3: #{tpu_custom_call.1} parent=1 // loop_header
      %s27 = sphi 0, %s31
      %p28 = scmp.ge.s32.totalorder %s27, 4
      %s37 = sphi 0, %s39
      %s40 = sphi 0, %s37
      %s41 = sphi 0, %s40
      %s57 = sphi 0, %s41
      %s63 = sphi 0, %s65
      %s66 = sphi 0, %s63
      %s67 = sphi 0, %s66
      %s83 = sphi 0, %s67
      %s87 = sphi 0, %s87
      %s89 = sphi 0, %s87
      %s90 = sphi 0, %s89
      %s104 = sphi 0, %s90
      %s108 = sphi 0, %s108
      %s110 = sphi 0, %s108
      %s111 = sphi 0, %s110
      %s125 = sphi 0, %s111
      %s129 = sphi 0, %s129
      %s131 = sphi 0, %s129
      %s132 = sphi 0, %s131
      %s146 = sphi 0, %s132
      %s150 = sphi 0, %s150
      %s152 = sphi 0, %s150
      %s153 = sphi 0, %s152
      %s167 = sphi 0, %s153
      %s171 = sphi 0, %s171
      %s173 = sphi 0, %s171
      %s174 = sphi 0, %s173
      %s188 = sphi 0, %s174
      %s192 = sphi 0, %s192
      %s194 = sphi 0, %s192
      %s195 = sphi 0, %s194
      %s209 = sphi 0, %s195
      %s213 = sphi 0, %s213
      %s215 = sphi 0, %s213
      %s216 = sphi 0, %s215
      %s230 = sphi 0, %s216
      %s234 = sphi 0, %s234
      %s236 = sphi 0, %s234
      %s237 = sphi 0, %s236
      %s251 = sphi 0, %s237
      %s255 = sphi 0, %s255
      %s257 = sphi 0, %s255
      %s258 = sphi 0, %s257
      %s272 = sphi 0, %s258
      %s276 = sphi 0, %s276
      %s278 = sphi 0, %s276
      %s279 = sphi 0, %s278
      %s293 = sphi 0, %s279
    $region4: #{tpu_custom_call.1} parent=1 // loop_header_branch
      %30 = sbr.rel (%p28) target = $region8
    $region5: #{tpu_custom_call.1} parent=1 // loop_body
      %s32 = ssub.s32 %s27, 1
      %s33 = ssub.s32 %s27, 2
      %s34 = sadd.s32 %s27, 1
      %s35 = ssub.s32 %s27, %s34
      %p36 = scmp.eq.s32.totalorder %s35, 0
      %s38 = sadd.s32 %s37, 1
      %s39 = scalar_select %p36, %s37, %s38
      %p42 = pneg %p36
      %p43 = scmp.eq.s32.totalorder %s27, 1
      %p44 = por %p42, %p43
      %p45 = scmp.ne.s32.totalorder %s37, %s40
      %p46 = scmp.eq.s32.totalorder %s27, 0
      %p47 = por %p45, %p46
      %p48 = scmp.ne.s32.totalorder %s37, %s40
      %p49 = scmp.eq.s32.totalorder %s32, 1
      %p50 = por %p48, %p49
      %p51 = scmp.ne.s32.totalorder %s40, %s41
      %p52 = scmp.eq.s32.totalorder %s32, 0
      %p53 = por %p51, %p52
      %p54 = scmp.ne.s32.totalorder %s40, %s41
      %p55 = scmp.eq.s32.totalorder %s33, 1
      %p56 = por %p54, %p55
      %p58 = scmp.ne.s32.totalorder %s41, %s57
      %p59 = scmp.eq.s32.totalorder %s33, 0
      %p60 = por %p58, %p59
      %s61 = ssub.s32 %s27, %s34
      %p62 = scmp.eq.s32.totalorder %s61, 0
      %s64 = sadd.s32 %s63, 1
      %s65 = scalar_select %p62, %s63, %s64
      %p68 = pneg %p62
      %p69 = scmp.eq.s32.totalorder %s27, 1
      %p70 = por %p68, %p69
      %p71 = scmp.ne.s32.totalorder %s63, %s66
      %p72 = scmp.eq.s32.totalorder %s27, 0
      %p73 = por %p71, %p72
      %p74 = scmp.ne.s32.totalorder %s63, %s66
      %p75 = scmp.eq.s32.totalorder %s32, 1
      %p76 = por %p74, %p75
      %p77 = scmp.ne.s32.totalorder %s66, %s67
      %p78 = scmp.eq.s32.totalorder %s32, 0
      %p79 = por %p77, %p78
      %p80 = scmp.ne.s32.totalorder %s66, %s67
      %p81 = scmp.eq.s32.totalorder %s33, 1
      %p82 = por %p80, %p81
      %p84 = scmp.ne.s32.totalorder %s67, %s83
      %p85 = scmp.eq.s32.totalorder %s33, 0
      %p86 = por %p84, %p85
      %s88 = sadd.s32 %s87, 1
      %p91 = scmp.eq.s32.totalorder %s27, 1
      %p92 = scmp.ne.s32.totalorder %s87, %s89
      %p93 = scmp.eq.s32.totalorder %s27, 0
      %p94 = por %p92, %p93
      %p95 = scmp.ne.s32.totalorder %s87, %s89
      %p96 = scmp.eq.s32.totalorder %s32, 1
      %p97 = por %p95, %p96
      %p98 = scmp.ne.s32.totalorder %s89, %s90
      %p99 = scmp.eq.s32.totalorder %s32, 0
      %p100 = por %p98, %p99
      %p101 = scmp.ne.s32.totalorder %s89, %s90
      %p102 = scmp.eq.s32.totalorder %s33, 1
      %p103 = por %p101, %p102
      %p105 = scmp.ne.s32.totalorder %s90, %s104
      %p106 = scmp.eq.s32.totalorder %s33, 0
      %p107 = por %p105, %p106
      %s109 = sadd.s32 %s108, 1
      %p112 = scmp.eq.s32.totalorder %s27, 1
      %p113 = scmp.ne.s32.totalorder %s108, %s110
      %p114 = scmp.eq.s32.totalorder %s27, 0
      %p115 = por %p113, %p114
      %p116 = scmp.ne.s32.totalorder %s108, %s110
      %p117 = scmp.eq.s32.totalorder %s32, 1
      %p118 = por %p116, %p117
      %p119 = scmp.ne.s32.totalorder %s110, %s111
      %p120 = scmp.eq.s32.totalorder %s32, 0
      %p121 = por %p119, %p120
      %p122 = scmp.ne.s32.totalorder %s110, %s111
      %p123 = scmp.eq.s32.totalorder %s33, 1
      %p124 = por %p122, %p123
      %p126 = scmp.ne.s32.totalorder %s111, %s125
      %p127 = scmp.eq.s32.totalorder %s33, 0
      %p128 = por %p126, %p127
      %s130 = sadd.s32 %s129, 1
      %p133 = scmp.eq.s32.totalorder %s27, 1
      %p134 = scmp.ne.s32.totalorder %s129, %s131
      %p135 = scmp.eq.s32.totalorder %s27, 0
      %p136 = por %p134, %p135
      %p137 = scmp.ne.s32.totalorder %s129, %s131
      %p138 = scmp.eq.s32.totalorder %s32, 1
      %p139 = por %p137, %p138
      %p140 = scmp.ne.s32.totalorder %s131, %s132
      %p141 = scmp.eq.s32.totalorder %s32, 0
      %p142 = por %p140, %p141
      %p143 = scmp.ne.s32.totalorder %s131, %s132
      %p144 = scmp.eq.s32.totalorder %s33, 1
      %p145 = por %p143, %p144
      %p147 = scmp.ne.s32.totalorder %s132, %s146
      %p148 = scmp.eq.s32.totalorder %s33, 0
      %p149 = por %p147, %p148
      %s151 = sadd.s32 %s150, 1
      %p154 = scmp.eq.s32.totalorder %s27, 1
      %p155 = scmp.ne.s32.totalorder %s150, %s152
      %p156 = scmp.eq.s32.totalorder %s27, 0
      %p157 = por %p155, %p156
      %p158 = scmp.ne.s32.totalorder %s150, %s152
      %p159 = scmp.eq.s32.totalorder %s32, 1
      %p160 = por %p158, %p159
      %p161 = scmp.ne.s32.totalorder %s152, %s153
      %p162 = scmp.eq.s32.totalorder %s32, 0
      %p163 = por %p161, %p162
      %p164 = scmp.ne.s32.totalorder %s152, %s153
      %p165 = scmp.eq.s32.totalorder %s33, 1
      %p166 = por %p164, %p165
      %p168 = scmp.ne.s32.totalorder %s153, %s167
      %p169 = scmp.eq.s32.totalorder %s33, 0
      %p170 = por %p168, %p169
      %s172 = sadd.s32 %s171, 1
      %p175 = scmp.eq.s32.totalorder %s27, 1
      %p176 = scmp.ne.s32.totalorder %s171, %s173
      %p177 = scmp.eq.s32.totalorder %s27, 0
      %p178 = por %p176, %p177
      %p179 = scmp.ne.s32.totalorder %s171, %s173
      %p180 = scmp.eq.s32.totalorder %s32, 1
      %p181 = por %p179, %p180
      %p182 = scmp.ne.s32.totalorder %s173, %s174
      %p183 = scmp.eq.s32.totalorder %s32, 0
      %p184 = por %p182, %p183
      %p185 = scmp.ne.s32.totalorder %s173, %s174
      %p186 = scmp.eq.s32.totalorder %s33, 1
      %p187 = por %p185, %p186
      %p189 = scmp.ne.s32.totalorder %s174, %s188
      %p190 = scmp.eq.s32.totalorder %s33, 0
      %p191 = por %p189, %p190
      %s193 = sadd.s32 %s192, 1
      %p196 = scmp.eq.s32.totalorder %s27, 1
      %p197 = scmp.ne.s32.totalorder %s192, %s194
      %p198 = scmp.eq.s32.totalorder %s27, 0
      %p199 = por %p197, %p198
      %p200 = scmp.ne.s32.totalorder %s192, %s194
      %p201 = scmp.eq.s32.totalorder %s32, 1
      %p202 = por %p200, %p201
      %p203 = scmp.ne.s32.totalorder %s194, %s195
      %p204 = scmp.eq.s32.totalorder %s32, 0
      %p205 = por %p203, %p204
      %p206 = scmp.ne.s32.totalorder %s194, %s195
      %p207 = scmp.eq.s32.totalorder %s33, 1
      %p208 = por %p206, %p207
      %p210 = scmp.ne.s32.totalorder %s195, %s209
      %p211 = scmp.eq.s32.totalorder %s33, 0
      %p212 = por %p210, %p211
      %s214 = sadd.s32 %s213, 1
      %p217 = scmp.eq.s32.totalorder %s27, 1
      %p218 = scmp.ne.s32.totalorder %s213, %s215
      %p219 = scmp.eq.s32.totalorder %s27, 0
      %p220 = por %p218, %p219
      %p221 = scmp.ne.s32.totalorder %s213, %s215
      %p222 = scmp.eq.s32.totalorder %s32, 1
      %p223 = por %p221, %p222
      %p224 = scmp.ne.s32.totalorder %s215, %s216
      %p225 = scmp.eq.s32.totalorder %s32, 0
      %p226 = por %p224, %p225
      %p227 = scmp.ne.s32.totalorder %s215, %s216
      %p228 = scmp.eq.s32.totalorder %s33, 1
      %p229 = por %p227, %p228
      %p231 = scmp.ne.s32.totalorder %s216, %s230
      %p232 = scmp.eq.s32.totalorder %s33, 0
      %p233 = por %p231, %p232
      %s235 = sadd.s32 %s234, 1
      %p238 = scmp.eq.s32.totalorder %s27, 1
      %p239 = scmp.ne.s32.totalorder %s234, %s236
      %p240 = scmp.eq.s32.totalorder %s27, 0
      %p241 = por %p239, %p240
      %p242 = scmp.ne.s32.totalorder %s234, %s236
      %p243 = scmp.eq.s32.totalorder %s32, 1
      %p244 = por %p242, %p243
      %p245 = scmp.ne.s32.totalorder %s236, %s237
      %p246 = scmp.eq.s32.totalorder %s32, 0
      %p247 = por %p245, %p246
      %p248 = scmp.ne.s32.totalorder %s236, %s237
      %p249 = scmp.eq.s32.totalorder %s33, 1
      %p250 = por %p248, %p249
      %p252 = scmp.ne.s32.totalorder %s237, %s251
      %p253 = scmp.eq.s32.totalorder %s33, 0
      %p254 = por %p252, %p253
      %s256 = sadd.s32 %s255, 1
      %p259 = scmp.eq.s32.totalorder %s27, 1
      %p260 = scmp.ne.s32.totalorder %s255, %s257
      %p261 = scmp.eq.s32.totalorder %s27, 0
      %p262 = por %p260, %p261
      %p263 = scmp.ne.s32.totalorder %s255, %s257
      %p264 = scmp.eq.s32.totalorder %s32, 1
      %p265 = por %p263, %p264
      %p266 = scmp.ne.s32.totalorder %s257, %s258
      %p267 = scmp.eq.s32.totalorder %s32, 0
      %p268 = por %p266, %p267
      %p269 = scmp.ne.s32.totalorder %s257, %s258
      %p270 = scmp.eq.s32.totalorder %s33, 1
      %p271 = por %p269, %p270
      %p273 = scmp.ne.s32.totalorder %s258, %s272
      %p274 = scmp.eq.s32.totalorder %s33, 0
      %p275 = por %p273, %p274
      %s277 = sadd.s32 %s276, 1
      %p280 = scmp.eq.s32.totalorder %s27, 1
      %p281 = scmp.ne.s32.totalorder %s276, %s278
      %p282 = scmp.eq.s32.totalorder %s27, 0
      %p283 = por %p281, %p282
      %p284 = scmp.ne.s32.totalorder %s276, %s278
      %p285 = scmp.eq.s32.totalorder %s32, 1
      %p286 = por %p284, %p285
      %p287 = scmp.ne.s32.totalorder %s278, %s279
      %p288 = scmp.eq.s32.totalorder %s32, 0
      %p289 = por %p287, %p288
      %p290 = scmp.ne.s32.totalorder %s278, %s279
      %p291 = scmp.eq.s32.totalorder %s33, 1
      %p292 = por %p290, %p291
      %p294 = scmp.ne.s32.totalorder %s279, %s293
      %p295 = scmp.eq.s32.totalorder %s33, 0
      %p296 = por %p294, %p295
      %p297 = scmp.le.s32.totalorder 1, %s27
      %p298 = scmp.lt.s32.totalorder %s27, 3
      %p299 = pnand %p297, %p298
      %p300 = pneg %p299
      // Predicated region
      $region9: #{tpu_custom_call.1} parent=5 // pred_check
        _
      $region10: #{tpu_custom_call.1} parent=5 // pred_check_branch
        %302 = sbr.rel (%p299) target = $region12
      $region11: #{tpu_custom_call.1} parent=5 // pred_region
        %s303 = ssub.s32 %s27, 1
        // Predicated region
        $region13: #{tpu_custom_call.1} parent=11 // pred_check
          %p304 = pneg %p100
        $region14: #{tpu_custom_call.1} parent=11 // pred_check_branch
          %306 = sbr.rel (%p304) target = $region16
        $region15: #{tpu_custom_call.1} parent=11 // pred_region
          _
        $region16: #{tpu_custom_call.1} parent=11 // pred_fallthru
          _
        // Predicated region
        $region17: #{tpu_custom_call.1} parent=11 // pred_check
          %p307 = pneg %p121
        $region18: #{tpu_custom_call.1} parent=11 // pred_check_branch
          %309 = sbr.rel (%p307) target = $region20
        $region19: #{tpu_custom_call.1} parent=11 // pred_region
          _
        $region20: #{tpu_custom_call.1} parent=11 // pred_fallthru
          _
        // Predicated region
        $region21: #{tpu_custom_call.1} parent=11 // pred_check
          %p310 = pneg %p142
        $region22: #{tpu_custom_call.1} parent=11 // pred_check_branch
          %312 = sbr.rel (%p310) target = $region24
        $region23: #{tpu_custom_call.1} parent=11 // pred_region
          %s314 = ssub.s32 1024, 1024
          %315 = vsyncadd [#allocation9], %s314
          %s316 = sshll.u32 [#allocation10], 4
          %s317 = int_to_ptr.vmem [resolvable:$true] %s316
          %322 = dma.hbm_to_vmem [thread:$0]  %s4, 1024, %s317, [#allocation9], 64, 64, 4
        $region24: #{tpu_custom_call.1} parent=11 // pred_fallthru
          _
        // Predicated region
        $region25: #{tpu_custom_call.1} parent=11 // pred_check
          %p323 = pneg %p163
        $region26: #{tpu_custom_call.1} parent=11 // pred_check_branch
          %325 = sbr.rel (%p323) target = $region28
        $region27: #{tpu_custom_call.1} parent=11 // pred_region
          _
        $region28: #{tpu_custom_call.1} parent=11 // pred_fallthru
          _
        // Predicated region
        $region29: #{tpu_custom_call.1} parent=11 // pred_check
          %p326 = pneg %p184
        $region30: #{tpu_custom_call.1} parent=11 // pred_check_branch
          %328 = sbr.rel (%p326) target = $region32
        $region31: #{tpu_custom_call.1} parent=11 // pred_region
          _
        $region32: #{tpu_custom_call.1} parent=11 // pred_fallthru
          _
        // Predicated region
        $region33: #{tpu_custom_call.1} parent=11 // pred_check
          %p329 = pneg %p205
        $region34: #{tpu_custom_call.1} parent=11 // pred_check_branch
          %331 = sbr.rel (%p329) target = $region36
        $region35: #{tpu_custom_call.1} parent=11 // pred_region
          _
        $region36: #{tpu_custom_call.1} parent=11 // pred_fallthru
          _
        // Predicated region
        $region37: #{tpu_custom_call.1} parent=11 // pred_check
          %p332 = pneg %p226
        $region38: #{tpu_custom_call.1} parent=11 // pred_check_branch
          %334 = sbr.rel (%p332) target = $region40
        $region39: #{tpu_custom_call.1} parent=11 // pred_region
          %s336 = ssub.s32 1024, 1024
          %337 = vsyncadd [#allocation12], %s336
          %s338 = sshll.u32 [#allocation11], 4
          %s339 = int_to_ptr.vmem [resolvable:$true] %s338
          %344 = dma.hbm_to_vmem [thread:$0]  %s8, 1024, %s339, [#allocation12], 64, 64, 4
        $region40: #{tpu_custom_call.1} parent=11 // pred_fallthru
          _
        // Predicated region
        $region41: #{tpu_custom_call.1} parent=11 // pred_check
          %p345 = pneg %p247
        $region42: #{tpu_custom_call.1} parent=11 // pred_check_branch
          %347 = sbr.rel (%p345) target = $region44
        $region43: #{tpu_custom_call.1} parent=11 // pred_region
          _
        $region44: #{tpu_custom_call.1} parent=11 // pred_fallthru
          _
      $region12: #{tpu_custom_call.1} parent=5 // pred_fallthru
        _
      %p348 = scmp.lt.s32.totalorder %s27, 2
      // Predicated region
      $region45: #{tpu_custom_call.1} parent=5 // pred_check
        %p349 = pneg %p348
      $region46: #{tpu_custom_call.1} parent=5 // pred_check_branch
        %351 = sbr.rel (%p349) target = $region48
      $region47: #{tpu_custom_call.1} parent=5 // pred_region
        // Predicated region
        $region49: #{tpu_custom_call.1} parent=47 // pred_check
          %p352 = pneg %p47
        $region50: #{tpu_custom_call.1} parent=47 // pred_check_branch
          %354 = sbr.rel (%p352) target = $region52
        $region51: #{tpu_custom_call.1} parent=47 // pred_region
          %s355 = sand.u32 %s37, 1
          %s356 = scalar_lea.sflag [#allocation6], %s355
          %s357 = sand.u32 %s37, 1
          %s358 = smul.addr %s357, 64
          %s359 = scalar_lea.vmem [#allocation5], %s358
          %s360 = smul.u32 8, %s27
          %s362 = ssub.s32 1024, 1024
          %363 = vsyncadd %s356, %s362
          %s364 = smul.addr %s360, 2
          %s365 = smul.addr %s364, 64
          %s366 = scalar_lea.hbm %s0, %s365
          %s367 = sshll.u32 %s359, 4
          %s368 = int_to_ptr.vmem [resolvable:$true] %s367
          %373 = dma.hbm_to_vmem [thread:$0]  %s366, 1024, %s368, %s356, 128, 128, 8
        $region52: #{tpu_custom_call.1} parent=47 // pred_fallthru
          _
        // Predicated region
        $region53: #{tpu_custom_call.1} parent=47 // pred_check
          %p374 = pneg %p73
        $region54: #{tpu_custom_call.1} parent=47 // pred_check_branch
          %376 = sbr.rel (%p374) target = $region56
        $region55: #{tpu_custom_call.1} parent=47 // pred_region
          %s377 = sand.u32 %s27, 1
          %s378 = scalar_lea.sflag [#allocation9], %s377
          %s379 = sand.u32 %s63, 1
          %s380 = smul.addr %s379, 64
          %s381 = scalar_lea.vmem [#allocation8], %s380
          %s382 = smul.u32 8, %s27
          %s384 = ssub.s32 1024, 1024
          %385 = vsyncadd %s378, %s384
          %s386 = smul.addr %s382, 2
          %s387 = smul.addr %s386, 64
          %s388 = scalar_lea.hbm %s1, %s387
          %s389 = sshll.u32 %s381, 4
          %s390 = int_to_ptr.vmem [resolvable:$true] %s389
          %395 = dma.hbm_to_vmem [thread:$0]  %s388, 1024, %s390, %s378, 128, 128, 8
        $region56: #{tpu_custom_call.1} parent=47 // pred_fallthru
          _
      $region48: #{tpu_custom_call.1} parent=5 // pred_fallthru
        _
      %p396 = scmp.le.s32.totalorder 1, %s27
      %p397 = scmp.lt.s32.totalorder %s27, 3
      %p398 = pnand %p396, %p397
      %p399 = pneg %p398
      // Predicated region
      $region57: #{tpu_custom_call.1} parent=5 // pred_check
        _
      $region58: #{tpu_custom_call.1} parent=5 // pred_check_branch
        %401 = sbr.rel (%p398) target = $region60
      $region59: #{tpu_custom_call.1} parent=5 // pred_region
        %s402 = ssub.s32 %s27, 1
        %s403 = sand.u32 %s40, 1
        %s404 = scalar_lea.sflag [#allocation6], %s403
        %s405 = sand.u32 %s40, 1
        %s406 = smul.addr %s405, 64
        %s407 = scalar_lea.vmem [#allocation5], %s406
        // Predicated region
        $region61: #{tpu_custom_call.1} parent=59 // pred_check
          %p408 = pneg %p53
        $region62: #{tpu_custom_call.1} parent=59 // pred_check_branch
          %410 = sbr.rel (%p408) target = $region64
        $region63: #{tpu_custom_call.1} parent=59 // pred_region
          %411 = dma.done %s404, 1024
        $region64: #{tpu_custom_call.1} parent=59 // pred_fallthru
          _
        %s412 = sand.u32 %s32, 1
        %s413 = scalar_lea.sflag [#allocation9], %s412
        %s414 = sand.u32 %s66, 1
        %s415 = smul.addr %s414, 64
        %s416 = scalar_lea.vmem [#allocation8], %s415
        // Predicated region
        $region65: #{tpu_custom_call.1} parent=59 // pred_check
          %p417 = pneg %p79
        $region66: #{tpu_custom_call.1} parent=59 // pred_check_branch
          %419 = sbr.rel (%p417) target = $region68
        $region67: #{tpu_custom_call.1} parent=59 // pred_region
          %420 = dma.done %s413, 1024
        $region68: #{tpu_custom_call.1} parent=59 // pred_fallthru
          _
        // Predicated region
        $region69: #{tpu_custom_call.1} parent=59 // pred_check
          %p421 = pneg %p142
        $region70: #{tpu_custom_call.1} parent=59 // pred_check_branch
          %423 = sbr.rel (%p421) target = $region72
        $region71: #{tpu_custom_call.1} parent=59 // pred_region
          %424 = dma.done [#allocation9], 1024
        $region72: #{tpu_custom_call.1} parent=59 // pred_fallthru
          _
        // Predicated region
        $region73: #{tpu_custom_call.1} parent=59 // pred_check
          %p425 = pneg %p226
        $region74: #{tpu_custom_call.1} parent=59 // pred_check_branch
          %427 = sbr.rel (%p425) target = $region76
        $region75: #{tpu_custom_call.1} parent=59 // pred_region
          %428 = dma.done [#allocation12], 1024
        $region76: #{tpu_custom_call.1} parent=59 // pred_fallthru
          _
        %s429 = sand.u32 %s40, 1
        %s430 = scalar_lea.sflag [#allocation6], %s429
        %s431 = sand.u32 %s40, 1
        %s432 = smul.addr %s431, 64
        %s433 = scalar_lea.vmem [#allocation5], %s432
        %p434 = pneg %p53
        %p435 = pneg %p50
        %s436 = sand.u32 %s32, 1
        %s437 = scalar_lea.sflag [#allocation9], %s436
        %s438 = sand.u32 %s66, 1
        %s439 = smul.addr %s438, 64
        %s440 = scalar_lea.vmem [#allocation8], %s439
        %p441 = pneg %p79
        %p442 = pneg %p76
        %p443 = pneg %p100
        %p444 = pneg %p97
        %p445 = pneg %p121
        %p446 = pneg %p118
        %p447 = pneg %p142
        %p448 = pneg %p139
        %p449 = pneg %p163
        %p450 = pneg %p160
        %p451 = pneg %p184
        %p452 = pneg %p181
        %p453 = pneg %p205
        %p454 = pneg %p202
        %p455 = pneg %p226
        %p456 = pneg %p223
        %p457 = pneg %p247
        %p458 = pneg %p244
        %p459 = pneg %p268
        %p460 = pneg %p265
        %p461 = pneg %p289
        %p462 = pneg %p286
        %s463 = smul.u32 8, %s32
        %s464 = smul.u32 8, %s32
        %v466 = vld [vmem:[%s407] sm:$0xff]
        %v467 = vld [vmem:[%s407 + $0x8] sm:$0xff]
        %v468 = vld [vmem:[%s407 + $0x10] sm:$0xff]
        %v469 = vld [vmem:[%s407 + $0x18] sm:$0xff]
        %v470 = vld [vmem:[%s407 + $0x20] sm:$0xff]
        %v471 = vld [vmem:[%s407 + $0x28] sm:$0xff]
        %v472 = vld [vmem:[%s407 + $0x30] sm:$0xff]
        %v473 = vld [vmem:[%s407 + $0x38] sm:$0xff]
        %v482 = vcombine.high %v466, %v466
        %v483 = vcombine.high %v467, %v467
        %v484 = vcombine.high %v468, %v468
        %v485 = vcombine.high %v469, %v469
        %v486 = vcombine.high %v470, %v470
        %v487 = vcombine.high %v471, %v471
        %v488 = vcombine.high %v472, %v472
        %v489 = vcombine.high %v473, %v473
        %vm498 = vcmask 1043456
        %v499 = vsel %vm498, %v466, 0.0
        %v500 = vsel %vm498, %v482, 0.0
        %v501 = vadd.f32 %v499, %v500
        %502 = vadd.xlane.f32.xlu0 %v501
        %v503 = vpop.xlane.xlu0 %502
        %v504 = vsel %vm498, %v467, 0.0
        %v505 = vsel %vm498, %v483, 0.0
        %v506 = vadd.f32 %v504, %v505
        %507 = vadd.xlane.f32.xlu0 %v506
        %v508 = vpop.xlane.xlu0 %507
        %v509 = vsel %vm498, %v468, 0.0
        %v510 = vsel %vm498, %v484, 0.0
        %v511 = vadd.f32 %v509, %v510
        %512 = vadd.xlane.f32.xlu0 %v511
        %v513 = vpop.xlane.xlu0 %512
        %v514 = vsel %vm498, %v469, 0.0
        %v515 = vsel %vm498, %v485, 0.0
        %v516 = vadd.f32 %v514, %v515
        %517 = vadd.xlane.f32.xlu0 %v516
        %v518 = vpop.xlane.xlu0 %517
        %v519 = vsel %vm498, %v470, 0.0
        %v520 = vsel %vm498, %v486, 0.0
        %v521 = vadd.f32 %v519, %v520
        %522 = vadd.xlane.f32.xlu0 %v521
        %v523 = vpop.xlane.xlu0 %522
        %v524 = vsel %vm498, %v471, 0.0
        %v525 = vsel %vm498, %v487, 0.0
        %v526 = vadd.f32 %v524, %v525
        %527 = vadd.xlane.f32.xlu0 %v526
        %v528 = vpop.xlane.xlu0 %527
        %v529 = vsel %vm498, %v472, 0.0
        %v530 = vsel %vm498, %v488, 0.0
        %v531 = vadd.f32 %v529, %v530
        %532 = vadd.xlane.f32.xlu0 %v531
        %v533 = vpop.xlane.xlu0 %532
        %v534 = vsel %vm498, %v473, 0.0
        %v535 = vsel %vm498, %v489, 0.0
        %v536 = vadd.f32 %v534, %v535
        %537 = vadd.xlane.f32.xlu0 %v536
        %v538 = vpop.xlane.xlu0 %537
        %v539 = vrcp.pop 256.0
        %v540 = vmul.f32 %v503, %v539
        %v541 = vmul.f32 %v508, %v539
        %v542 = vmul.f32 %v513, %v539
        %v543 = vmul.f32 %v518, %v539
        %v544 = vmul.f32 %v523, %v539
        %v545 = vmul.f32 %v528, %v539
        %v546 = vmul.f32 %v533, %v539
        %v547 = vmul.f32 %v538, %v539
        %v548 = vpack.c.bf16 %v540, %v540
        %v549 = vpack.c.bf16 %v541, %v541
        %v550 = vpack.c.bf16 %v542, %v542
        %v551 = vpack.c.bf16 %v543, %v543
        %v552 = vpack.c.bf16 %v544, %v544
        %v553 = vpack.c.bf16 %v545, %v545
        %v554 = vpack.c.bf16 %v546, %v546
        %v555 = vpack.c.bf16 %v547, %v547
        %v556 = vld [vmem:[%s416] sm:$0xff]
        %v557 = vld [vmem:[%s416 + $0x8] sm:$0xff]
        %v558 = vld [vmem:[%s416 + $0x10] sm:$0xff]
        %v559 = vld [vmem:[%s416 + $0x18] sm:$0xff]
        %v560 = vld [vmem:[%s416 + $0x20] sm:$0xff]
        %v561 = vld [vmem:[%s416 + $0x28] sm:$0xff]
        %v562 = vld [vmem:[%s416 + $0x30] sm:$0xff]
        %v563 = vld [vmem:[%s416 + $0x38] sm:$0xff]
        %v572 = vcombine.high %v556, %v556
        %v573 = vcombine.high %v557, %v557
        %v574 = vcombine.high %v558, %v558
        %v575 = vcombine.high %v559, %v559
        %v576 = vcombine.high %v560, %v560
        %v577 = vcombine.high %v561, %v561
        %v578 = vcombine.high %v562, %v562
        %v579 = vcombine.high %v563, %v563
        %v588 = vsel %vm498, %v556, 0.0
        %v589 = vsel %vm498, %v572, 0.0
        %v590 = vadd.f32 %v588, %v589
        %591 = vadd.xlane.f32.xlu0 %v590
        %v592 = vpop.xlane.xlu0 %591
        %v593 = vsel %vm498, %v557, 0.0
        %v594 = vsel %vm498, %v573, 0.0
        %v595 = vadd.f32 %v593, %v594
        %596 = vadd.xlane.f32.xlu0 %v595
        %v597 = vpop.xlane.xlu0 %596
        %v598 = vsel %vm498, %v558, 0.0
        %v599 = vsel %vm498, %v574, 0.0
        %v600 = vadd.f32 %v598, %v599
        %601 = vadd.xlane.f32.xlu0 %v600
        %v602 = vpop.xlane.xlu0 %601
        %v603 = vsel %vm498, %v559, 0.0
        %v604 = vsel %vm498, %v575, 0.0
        %v605 = vadd.f32 %v603, %v604
        %606 = vadd.xlane.f32.xlu0 %v605
        %v607 = vpop.xlane.xlu0 %606
        %v608 = vsel %vm498, %v560, 0.0
        %v609 = vsel %vm498, %v576, 0.0
        %v610 = vadd.f32 %v608, %v609
        %611 = vadd.xlane.f32.xlu0 %v610
        %v612 = vpop.xlane.xlu0 %611
        %v613 = vsel %vm498, %v561, 0.0
        %v614 = vsel %vm498, %v577, 0.0
        %v615 = vadd.f32 %v613, %v614
        %616 = vadd.xlane.f32.xlu0 %v615
        %v617 = vpop.xlane.xlu0 %616
        %v618 = vsel %vm498, %v562, 0.0
        %v619 = vsel %vm498, %v578, 0.0
        %v620 = vadd.f32 %v618, %v619
        %621 = vadd.xlane.f32.xlu0 %v620
        %v622 = vpop.xlane.xlu0 %621
        %v623 = vsel %vm498, %v563, 0.0
        %v624 = vsel %vm498, %v579, 0.0
        %v625 = vadd.f32 %v623, %v624
        %626 = vadd.xlane.f32.xlu0 %v625
        %v627 = vpop.xlane.xlu0 %626
        %v628 = vmul.f32 %v592, %v539
        %v629 = vmul.f32 %v597, %v539
        %v630 = vmul.f32 %v602, %v539
        %v631 = vmul.f32 %v607, %v539
        %v632 = vmul.f32 %v612, %v539
        %v633 = vmul.f32 %v617, %v539
        %v634 = vmul.f32 %v622, %v539
        %v635 = vmul.f32 %v627, %v539
        %v636 = vpack.c.bf16 %v628, %v628
        %v637 = vpack.c.bf16 %v629, %v629
        %v638 = vpack.c.bf16 %v630, %v630
        %v639 = vpack.c.bf16 %v631, %v631
        %v640 = vpack.c.bf16 %v632, %v632
        %v641 = vpack.c.bf16 %v633, %v633
        %v642 = vpack.c.bf16 %v634, %v634
        %v643 = vpack.c.bf16 %v635, %v635
        %v644 = vld [vmem:[%s2] sm:$0x3]
        %v645 = vld [vmem:[%s3] sm:$0x1]
        %v646 = vld [vmem:[#allocation10] sm:$0xf]
        %v647 = vld [vmem:[#allocation10 + $0x4] sm:$0xf]
        %v648 = vld [vmem:[#allocation10 + $0x8] sm:$0xf]
        %v649 = vld [vmem:[#allocation10 + $0xc] sm:$0xf]
        %v650 = vld [vmem:[#allocation10 + $0x10] sm:$0xf]
        %v651 = vld [vmem:[#allocation10 + $0x14] sm:$0xf]
        %v652 = vld [vmem:[#allocation10 + $0x18] sm:$0xf]
        %v653 = vld [vmem:[#allocation10 + $0x1c] sm:$0xf]
        %v654 = vld [vmem:[#allocation10 + $0x20] sm:$0xf]
        %v655 = vld [vmem:[#allocation10 + $0x24] sm:$0xf]
        %v656 = vld [vmem:[#allocation10 + $0x28] sm:$0xf]
        %v657 = vld [vmem:[#allocation10 + $0x2c] sm:$0xf]
        %v658 = vld [vmem:[#allocation10 + $0x30] sm:$0xf]
        %v659 = vld [vmem:[#allocation10 + $0x34] sm:$0xf]
        %v660 = vld [vmem:[#allocation10 + $0x38] sm:$0xf]
        %v661 = vld [vmem:[#allocation10 + $0x3c] sm:$0xf]
        %v662 = vld [vmem:[%s5] sm:$0x1]
        %v663 = vld [vmem:[%s6] sm:$0x3]
        %v664 = vld [vmem:[%s7] sm:$0x1]
        %v665 = vld [vmem:[#allocation11] sm:$0xf]
        %v666 = vld [vmem:[#allocation11 + $0x4] sm:$0xf]
        %v667 = vld [vmem:[#allocation11 + $0x8] sm:$0xf]
        %v668 = vld [vmem:[#allocation11 + $0xc] sm:$0xf]
        %v669 = vld [vmem:[#allocation11 + $0x10] sm:$0xf]
        %v670 = vld [vmem:[#allocation11 + $0x14] sm:$0xf]
        %v671 = vld [vmem:[#allocation11 + $0x18] sm:$0xf]
        %v672 = vld [vmem:[#allocation11 + $0x1c] sm:$0xf]
        %v673 = vld [vmem:[#allocation11 + $0x20] sm:$0xf]
        %v674 = vld [vmem:[#allocation11 + $0x24] sm:$0xf]
        %v675 = vld [vmem:[#allocation11 + $0x28] sm:$0xf]
        %v676 = vld [vmem:[#allocation11 + $0x2c] sm:$0xf]
        %v677 = vld [vmem:[#allocation11 + $0x30] sm:$0xf]
        %v678 = vld [vmem:[#allocation11 + $0x34] sm:$0xf]
        %v679 = vld [vmem:[#allocation11 + $0x38] sm:$0xf]
        %v680 = vld [vmem:[#allocation11 + $0x3c] sm:$0xf]
        %v681 = vld [vmem:[%s9] sm:$0x1]
        %v683 = vlaneseq
        %v684 = vshrl.u32 %v683, 7
        %v685 = vsub.s32 0, %v684
        %v686 = vrot.slane %v645, %v685
        %v696 = vunpack.c.l.b16 %v548
        %v697 = vunpack.c.l.b16 %v549
        %v698 = vunpack.c.l.b16 %v550
        %v699 = vunpack.c.l.b16 %v551
        %v700 = vunpack.c.l.b16 %v552
        %v701 = vunpack.c.l.b16 %v553
        %v702 = vunpack.c.l.b16 %v554
        %v703 = vunpack.c.l.b16 %v555
        %v704 = vlaneseq
        %v705 = vand.u32 %v704, 127
        %v706 = vlaneseq
        %v707 = vshrl.u32 %v706, 7
        %v708 = vsub.s32 %v705, %v707
        %v709 = vrot.slane %v696, %v708
        %v710 = vlaneseq
        %v711 = vshrl.u32 %v710, 7
        %v712 = vsub.s32 %v705, %v711
        %v713 = vrot.slane %v697, %v712
        %v714 = vlaneseq
        %v715 = vshrl.u32 %v714, 7
        %v716 = vsub.s32 %v705, %v715
        %v717 = vrot.slane %v698, %v716
        %v718 = vlaneseq
        %v719 = vshrl.u32 %v718, 7
        %v720 = vsub.s32 %v705, %v719
        %v721 = vrot.slane %v699, %v720
        %v722 = vlaneseq
        %v723 = vshrl.u32 %v722, 7
        %v724 = vsub.s32 %v705, %v723
        %v725 = vrot.slane %v700, %v724
        %v726 = vlaneseq
        %v727 = vshrl.u32 %v726, 7
        %v728 = vsub.s32 %v705, %v727
        %v729 = vrot.slane %v701, %v728
        %v730 = vlaneseq
        %v731 = vshrl.u32 %v730, 7
        %v732 = vsub.s32 %v705, %v731
        %v733 = vrot.slane %v702, %v732
        %v734 = vlaneseq
        %v735 = vshrl.u32 %v734, 7
        %v736 = vsub.s32 %v705, %v735
        %v737 = vrot.slane %v703, %v736
        %vm738 = vcmask 1041409
        %v739 = vsel %vm738, %v713, %v709
        %vm740 = vcmask 1042434
        %v741 = vsel %vm740, %v717, %v739
        %vm742 = vcmask 1043459
        %v743 = vsel %vm742, %v721, %v741
        %vm744 = vcmask 1044484
        %v745 = vsel %vm744, %v725, %v743
        %vm746 = vcmask 1045509
        %v747 = vsel %vm746, %v729, %v745
        %vm748 = vcmask 1046534
        %v749 = vsel %vm748, %v733, %v747
        %vm750 = vcmask 1047559
        %v751 = vsel %vm750, %v737, %v749
        %v752 = vpack.c.b16 %v751, %v751
        %vm753 = vcmask 31744
        %v755 = vsel %vm753, %v752, 0
        %vm757 = vcmask 1041408
        %v759 = vsel %vm757, %v644, 0
        %761 = vmatprep.subr.bf16.mxu0 0
        %762 = vmatpush1.bf16.msra.mxu0 0
        %763 = vmatprep.subr.bf16.mxu0 0
        %764 = vmatpush1.bf16.msra.mxu0 0
        %765 = vmatprep.subr.bf16.mxu0 0
        %766 = vmatpush1.bf16.msra.mxu0 0
        %767 = vmatprep.subr.bf16.mxu0 0
        %768 = vmatpush1.bf16.msra.mxu0 0
        %769 = vmatprep.subr.bf16.mxu0 0
        %770 = vmatpush1.bf16.msra.mxu0 0
        %771 = vmatprep.subr.bf16.mxu0 0
        %772 = vmatpush1.bf16.msra.mxu0 0
        %773 = vmatprep.subr.bf16.mxu0 0
        %774 = vmatpush1.bf16.msra.mxu0 0
        %775 = vmatprep.subr.bf16.mxu0 0
        %776 = vmatpush1.bf16.msra.mxu0 %v759
        %777 = vmatprep.subr.bf16.mxu0 0
        %778 = vmatpush2.bf16.msra.mxu0 0
        %779 = vmatprep.subr.bf16.mxu0 0
        %780 = vmatpush2.bf16.msra.mxu0 0
        %781 = vmatprep.subr.bf16.mxu0 0
        %782 = vmatpush2.bf16.msra.mxu0 0
        %783 = vmatprep.subr.bf16.mxu0 0
        %784 = vmatpush2.bf16.msra.mxu0 0
        %785 = vmatprep.subr.bf16.mxu0 0
        %786 = vmatpush2.bf16.msra.mxu0 0
        %787 = vmatprep.subr.bf16.mxu0 0
        %788 = vmatpush2.bf16.msra.mxu0 0
        %789 = vmatprep.subr.bf16.mxu0 0
        %790 = vmatpush2.bf16.msra.mxu0 0
        %791 = vmatprep.subr.bf16.mxu0 0
        %792 = vmatpush2.bf16.msra.mxu0 0
        %793 = vmatprep.mubr.bf16.mxu0 0
        %794 = vmatmul.mubr.bf16.gmra.mxu0 %v755
        %v795 = vpop.f32.mrf.mxu0
        %v796 = vadd.f32 %v686, %v795
        %v797 = vpop.f32.mrf.mxu0
        %v798 = vpop.f32.mrf.mxu0
        %v799 = vpop.f32.mrf.mxu0
        %800 = vdwg.mxu0
        %v801 = vmax.f32 %v796, 0.0
        %v802 = vpack.c.bf16 %v801, %v801
        %v804 = vlaneseq
        %v805 = vshrl.u32 %v804, 7
        %v806 = vsub.s32 0, %v805
        %v807 = vrot.slane %v662, %v806
        %v825 = vunpack.c.l.b16 %v646
        %v826 = vunpack.c.l.b16 %v647
        %v827 = vunpack.c.l.b16 %v648
        %v828 = vunpack.c.l.b16 %v649
        %v829 = vunpack.c.l.b16 %v650
        %v830 = vunpack.c.l.b16 %v651
        %v831 = vunpack.c.l.b16 %v652
        %v832 = vunpack.c.l.b16 %v653
        %v833 = vunpack.c.l.b16 %v654
        %v834 = vunpack.c.l.b16 %v655
        %v835 = vunpack.c.l.b16 %v656
        %v836 = vunpack.c.l.b16 %v657
        %v837 = vunpack.c.l.b16 %v658
        %v838 = vunpack.c.l.b16 %v659
        %v839 = vunpack.c.l.b16 %v660
        %v840 = vunpack.c.l.b16 %v661
        %v841 = vpack.c.b16 %v826, %v825
        %v842 = vpack.c.b16 %v828, %v827
        %v843 = vpack.c.b16 %v830, %v829
        %v844 = vpack.c.b16 %v832, %v831
        %v845 = vpack.c.b16 %v834, %v833
        %v846 = vpack.c.b16 %v836, %v835
        %v847 = vpack.c.b16 %v838, %v837
        %v848 = vpack.c.b16 %v840, %v839
        %857 = vmatprep.subr.bf16.mxu0 0
        %858 = vmatpush1.bf16.msra.mxu0 %v848
        %859 = vmatprep.subr.bf16.mxu0 0
        %860 = vmatpush1.bf16.msra.mxu0 %v847
        %861 = vmatprep.subr.bf16.mxu0 0
        %862 = vmatpush1.bf16.msra.mxu0 %v846
        %863 = vmatprep.subr.bf16.mxu0 0
        %864 = vmatpush1.bf16.msra.mxu0 %v845
        %865 = vmatprep.subr.bf16.mxu0 0
        %866 = vmatpush1.bf16.msra.mxu0 %v844
        %867 = vmatprep.subr.bf16.mxu0 0
        %868 = vmatpush1.bf16.msra.mxu0 %v843
        %869 = vmatprep.subr.bf16.mxu0 0
        %870 = vmatpush1.bf16.msra.mxu0 %v842
        %871 = vmatprep.subr.bf16.mxu0 0
        %872 = vmatpush1.bf16.msra.mxu0 %v841
        %873 = vmatprep.subr.bf16.mxu0 0
        %874 = vmatpush2.bf16.msra.mxu0 0
        %875 = vmatprep.subr.bf16.mxu0 0
        %876 = vmatpush2.bf16.msra.mxu0 0
        %877 = vmatprep.subr.bf16.mxu0 0
        %878 = vmatpush2.bf16.msra.mxu0 0
        %879 = vmatprep.subr.bf16.mxu0 0
        %880 = vmatpush2.bf16.msra.mxu0 0
        %881 = vmatprep.subr.bf16.mxu0 0
        %882 = vmatpush2.bf16.msra.mxu0 0
        %883 = vmatprep.subr.bf16.mxu0 0
        %884 = vmatpush2.bf16.msra.mxu0 0
        %885 = vmatprep.subr.bf16.mxu0 0
        %886 = vmatpush2.bf16.msra.mxu0 0
        %887 = vmatprep.subr.bf16.mxu0 0
        %888 = vmatpush2.bf16.msra.mxu0 0
        %889 = vmatprep.mubr.bf16.mxu0 0
        %890 = vmatmul.mubr.bf16.gmra.mxu0 %v802
        %v891 = vpop.f32.mrf.mxu0
        %v892 = vadd.f32 %v807, %v891
        %v893 = vpop.f32.mrf.mxu0
        %v894 = vpop.f32.mrf.mxu0
        %v895 = vpop.f32.mrf.mxu0
        %896 = vdwg.mxu0
        %v897 = vmul.f32 %v892, %v892
        %898 = vadd.xlane.f32.xlu0 %v897
        %v899 = vpop.xlane.xlu0 %898
        %v900 = vadd.f32 %v899, 1e-12
        %v901 = vrsqrt.pop %v900
        %v902 = vmul.f32 %v892, %v901
        %v911 = vunpack.c.l.b16 %v636
        %v912 = vunpack.c.l.b16 %v637
        %v913 = vunpack.c.l.b16 %v638
        %v914 = vunpack.c.l.b16 %v639
        %v915 = vunpack.c.l.b16 %v640
        %v916 = vunpack.c.l.b16 %v641
        %v917 = vunpack.c.l.b16 %v642
        %v918 = vunpack.c.l.b16 %v643
        %v919 = vlaneseq
        %v920 = vshrl.u32 %v919, 7
        %v921 = vsub.s32 %v705, %v920
        %v922 = vrot.slane %v911, %v921
        %v923 = vlaneseq
        %v924 = vshrl.u32 %v923, 7
        %v925 = vsub.s32 %v705, %v924
        %v926 = vrot.slane %v912, %v925
        %v927 = vlaneseq
        %v928 = vshrl.u32 %v927, 7
        %v929 = vsub.s32 %v705, %v928
        %v930 = vrot.slane %v913, %v929
        %v931 = vlaneseq
        %v932 = vshrl.u32 %v931, 7
        %v933 = vsub.s32 %v705, %v932
        %v934 = vrot.slane %v914, %v933
        %v935 = vlaneseq
        %v936 = vshrl.u32 %v935, 7
        %v937 = vsub.s32 %v705, %v936
        %v938 = vrot.slane %v915, %v937
        %v939 = vlaneseq
        %v940 = vshrl.u32 %v939, 7
        %v941 = vsub.s32 %v705, %v940
        %v942 = vrot.slane %v916, %v941
        %v943 = vlaneseq
        %v944 = vshrl.u32 %v943, 7
        %v945 = vsub.s32 %v705, %v944
        %v946 = vrot.slane %v917, %v945
        %v947 = vlaneseq
        %v948 = vshrl.u32 %v947, 7
        %v949 = vsub.s32 %v705, %v948
        %v950 = vrot.slane %v918, %v949
        %v951 = vsel %vm738, %v926, %v922
        %v952 = vsel %vm740, %v930, %v951
        %v953 = vsel %vm742, %v934, %v952
        %v954 = vsel %vm744, %v938, %v953
        %v955 = vsel %vm746, %v942, %v954
        %v956 = vsel %vm748, %v946, %v955
        %v957 = vsel %vm750, %v950, %v956
        %v958 = vpack.c.b16 %v957, %v957
        %v960 = vsel %vm753, %v958, 0
        %962 = vmatprep.subr.bf16.mxu0 0
        %963 = vmatpush1.bf16.msra.mxu0 0
        %964 = vmatprep.subr.bf16.mxu0 0
        %965 = vmatpush1.bf16.msra.mxu0 0
        %966 = vmatprep.subr.bf16.mxu0 0
        %967 = vmatpush1.bf16.msra.mxu0 0
        %968 = vmatprep.subr.bf16.mxu0 0
        %969 = vmatpush1.bf16.msra.mxu0 0
        %970 = vmatprep.subr.bf16.mxu0 0
        %971 = vmatpush1.bf16.msra.mxu0 0
        %972 = vmatprep.subr.bf16.mxu0 0
        %973 = vmatpush1.bf16.msra.mxu0 0
        %974 = vmatprep.subr.bf16.mxu0 0
        %975 = vmatpush1.bf16.msra.mxu0 0
        %976 = vmatprep.subr.bf16.mxu0 0
        %977 = vmatpush1.bf16.msra.mxu0 %v759
        %978 = vmatprep.subr.bf16.mxu0 0
        %979 = vmatpush2.bf16.msra.mxu0 0
        %980 = vmatprep.subr.bf16.mxu0 0
        %981 = vmatpush2.bf16.msra.mxu0 0
        %982 = vmatprep.subr.bf16.mxu0 0
        %983 = vmatpush2.bf16.msra.mxu0 0
        %984 = vmatprep.subr.bf16.mxu0 0
        %985 = vmatpush2.bf16.msra.mxu0 0
        %986 = vmatprep.subr.bf16.mxu0 0
        %987 = vmatpush2.bf16.msra.mxu0 0
        %988 = vmatprep.subr.bf16.mxu0 0
        %989 = vmatpush2.bf16.msra.mxu0 0
        %990 = vmatprep.subr.bf16.mxu0 0
        %991 = vmatpush2.bf16.msra.mxu0 0
        %992 = vmatprep.subr.bf16.mxu0 0
        %993 = vmatpush2.bf16.msra.mxu0 0
        %994 = vmatprep.mubr.bf16.mxu0 0
        %995 = vmatmul.mubr.bf16.gmra.mxu0 %v960
        %v996 = vpop.f32.mrf.mxu0
        %v997 = vadd.f32 %v686, %v996
        %v998 = vpop.f32.mrf.mxu0
        %v999 = vpop.f32.mrf.mxu0
        %v1000 = vpop.f32.mrf.mxu0
        %1001 = vdwg.mxu0
        %v1002 = vmax.f32 %v997, 0.0
        %v1003 = vpack.c.bf16 %v1002, %v1002
        %1004 = vmatprep.subr.bf16.mxu0 0
        %1005 = vmatpush1.bf16.msra.mxu0 %v848
        %1006 = vmatprep.subr.bf16.mxu0 0
        %1007 = vmatpush1.bf16.msra.mxu0 %v847
        %1008 = vmatprep.subr.bf16.mxu0 0
        %1009 = vmatpush1.bf16.msra.mxu0 %v846
        %1010 = vmatprep.subr.bf16.mxu0 0
        %1011 = vmatpush1.bf16.msra.mxu0 %v845
        %1012 = vmatprep.subr.bf16.mxu0 0
        %1013 = vmatpush1.bf16.msra.mxu0 %v844
        %1014 = vmatprep.subr.bf16.mxu0 0
        %1015 = vmatpush1.bf16.msra.mxu0 %v843
        %1016 = vmatprep.subr.bf16.mxu0 0
        %1017 = vmatpush1.bf16.msra.mxu0 %v842
        %1018 = vmatprep.subr.bf16.mxu0 0
        %1019 = vmatpush1.bf16.msra.mxu0 %v841
        %1020 = vmatprep.subr.bf16.mxu0 0
        %1021 = vmatpush2.bf16.msra.mxu0 0
        %1022 = vmatprep.subr.bf16.mxu0 0
        %1023 = vmatpush2.bf16.msra.mxu0 0
        %1024 = vmatprep.subr.bf16.mxu0 0
        %1025 = vmatpush2.bf16.msra.mxu0 0
        %1026 = vmatprep.subr.bf16.mxu0 0
        %1027 = vmatpush2.bf16.msra.mxu0 0
        %1028 = vmatprep.subr.bf16.mxu0 0
        %1029 = vmatpush2.bf16.msra.mxu0 0
        %1030 = vmatprep.subr.bf16.mxu0 0
        %1031 = vmatpush2.bf16.msra.mxu0 0
        %1032 = vmatprep.subr.bf16.mxu0 0
        %1033 = vmatpush2.bf16.msra.mxu0 0
        %1034 = vmatprep.subr.bf16.mxu0 0
        %1035 = vmatpush2.bf16.msra.mxu0 0
        %1036 = vmatprep.mubr.bf16.mxu0 0
        %1037 = vmatmul.mubr.bf16.gmra.mxu0 %v1003
        %v1038 = vpop.f32.mrf.mxu0
        %v1039 = vadd.f32 %v807, %v1038
        %v1040 = vpop.f32.mrf.mxu0
        %v1041 = vpop.f32.mrf.mxu0
        %v1042 = vpop.f32.mrf.mxu0
        %1043 = vdwg.mxu0
        %v1044 = vmul.f32 %v1039, %v1039
        %1045 = vadd.xlane.f32.xlu0 %v1044
        %v1046 = vpop.xlane.xlu0 %1045
        %v1047 = vadd.f32 %v1046, 1e-12
        %v1048 = vrsqrt.pop %v1047
        %v1049 = vmul.f32 %v1039, %v1048
        %v1051 = vlaneseq
        %v1052 = vshrl.u32 %v1051, 7
        %v1053 = vsub.s32 0, %v1052
        %v1054 = vrot.slane %v664, %v1053
        %v1057 = vsel %vm757, %v663, 0
        %1059 = vmatprep.subr.bf16.mxu0 0
        %1060 = vmatpush1.bf16.msra.mxu0 0
        %1061 = vmatprep.subr.bf16.mxu0 0
        %1062 = vmatpush1.bf16.msra.mxu0 0
        %1063 = vmatprep.subr.bf16.mxu0 0
        %1064 = vmatpush1.bf16.msra.mxu0 0
        %1065 = vmatprep.subr.bf16.mxu0 0
        %1066 = vmatpush1.bf16.msra.mxu0 0
        %1067 = vmatprep.subr.bf16.mxu0 0
        %1068 = vmatpush1.bf16.msra.mxu0 0
        %1069 = vmatprep.subr.bf16.mxu0 0
        %1070 = vmatpush1.bf16.msra.mxu0 0
        %1071 = vmatprep.subr.bf16.mxu0 0
        %1072 = vmatpush1.bf16.msra.mxu0 0
        %1073 = vmatprep.subr.bf16.mxu0 0
        %1074 = vmatpush1.bf16.msra.mxu0 %v1057
        %1075 = vmatprep.subr.bf16.mxu0 0
        %1076 = vmatpush2.bf16.msra.mxu0 0
        %1077 = vmatprep.subr.bf16.mxu0 0
        %1078 = vmatpush2.bf16.msra.mxu0 0
        %1079 = vmatprep.subr.bf16.mxu0 0
        %1080 = vmatpush2.bf16.msra.mxu0 0
        %1081 = vmatprep.subr.bf16.mxu0 0
        %1082 = vmatpush2.bf16.msra.mxu0 0
        %1083 = vmatprep.subr.bf16.mxu0 0
        %1084 = vmatpush2.bf16.msra.mxu0 0
        %1085 = vmatprep.subr.bf16.mxu0 0
        %1086 = vmatpush2.bf16.msra.mxu0 0
        %1087 = vmatprep.subr.bf16.mxu0 0
        %1088 = vmatpush2.bf16.msra.mxu0 0
        %1089 = vmatprep.subr.bf16.mxu0 0
        %1090 = vmatpush2.bf16.msra.mxu0 0
        %1091 = vmatprep.mubr.bf16.mxu0 0
        %1092 = vmatmul.mubr.bf16.gmra.mxu0 %v755
        %v1093 = vpop.f32.mrf.mxu0
        %v1094 = vadd.f32 %v1054, %v1093
        %v1095 = vpop.f32.mrf.mxu0
        %v1096 = vpop.f32.mrf.mxu0
        %v1097 = vpop.f32.mrf.mxu0
        %1098 = vdwg.mxu0
        %v1099 = vmax.f32 %v1094, 0.0
        %v1100 = vpack.c.bf16 %v1099, %v1099
        %v1102 = vlaneseq
        %v1103 = vshrl.u32 %v1102, 7
        %v1104 = vsub.s32 0, %v1103
        %v1105 = vrot.slane %v681, %v1104
        %v1123 = vunpack.c.l.b16 %v665
        %v1124 = vunpack.c.l.b16 %v666
        %v1125 = vunpack.c.l.b16 %v667
        %v1126 = vunpack.c.l.b16 %v668
        %v1127 = vunpack.c.l.b16 %v669
        %v1128 = vunpack.c.l.b16 %v670
        %v1129 = vunpack.c.l.b16 %v671
        %v1130 = vunpack.c.l.b16 %v672
        %v1131 = vunpack.c.l.b16 %v673
        %v1132 = vunpack.c.l.b16 %v674
        %v1133 = vunpack.c.l.b16 %v675
        %v1134 = vunpack.c.l.b16 %v676
        %v1135 = vunpack.c.l.b16 %v677
        %v1136 = vunpack.c.l.b16 %v678
        %v1137 = vunpack.c.l.b16 %v679
        %v1138 = vunpack.c.l.b16 %v680
        %v1139 = vpack.c.b16 %v1124, %v1123
        %v1140 = vpack.c.b16 %v1126, %v1125
        %v1141 = vpack.c.b16 %v1128, %v1127
        %v1142 = vpack.c.b16 %v1130, %v1129
        %v1143 = vpack.c.b16 %v1132, %v1131
        %v1144 = vpack.c.b16 %v1134, %v1133
        %v1145 = vpack.c.b16 %v1136, %v1135
        %v1146 = vpack.c.b16 %v1138, %v1137
        %1155 = vmatprep.subr.bf16.mxu0 0
        %1156 = vmatpush1.bf16.msra.mxu0 %v1146
        %1157 = vmatprep.subr.bf16.mxu0 0
        %1158 = vmatpush1.bf16.msra.mxu0 %v1145
        %1159 = vmatprep.subr.bf16.mxu0 0
        %1160 = vmatpush1.bf16.msra.mxu0 %v1144
        %1161 = vmatprep.subr.bf16.mxu0 0
        %1162 = vmatpush1.bf16.msra.mxu0 %v1143
        %1163 = vmatprep.subr.bf16.mxu0 0
        %1164 = vmatpush1.bf16.msra.mxu0 %v1142
        %1165 = vmatprep.subr.bf16.mxu0 0
        %1166 = vmatpush1.bf16.msra.mxu0 %v1141
        %1167 = vmatprep.subr.bf16.mxu0 0
        %1168 = vmatpush1.bf16.msra.mxu0 %v1140
        %1169 = vmatprep.subr.bf16.mxu0 0
        %1170 = vmatpush1.bf16.msra.mxu0 %v1139
        %1171 = vmatprep.subr.bf16.mxu0 0
        %1172 = vmatpush2.bf16.msra.mxu0 0
        %1173 = vmatprep.subr.bf16.mxu0 0
        %1174 = vmatpush2.bf16.msra.mxu0 0
        %1175 = vmatprep.subr.bf16.mxu0 0
        %1176 = vmatpush2.bf16.msra.mxu0 0
        %1177 = vmatprep.subr.bf16.mxu0 0
        %1178 = vmatpush2.bf16.msra.mxu0 0
        %1179 = vmatprep.subr.bf16.mxu0 0
        %1180 = vmatpush2.bf16.msra.mxu0 0
        %1181 = vmatprep.subr.bf16.mxu0 0
        %1182 = vmatpush2.bf16.msra.mxu0 0
        %1183 = vmatprep.subr.bf16.mxu0 0
        %1184 = vmatpush2.bf16.msra.mxu0 0
        %1185 = vmatprep.subr.bf16.mxu0 0
        %1186 = vmatpush2.bf16.msra.mxu0 0
        %1187 = vmatprep.mubr.bf16.mxu0 0
        %1188 = vmatmul.mubr.bf16.gmra.mxu0 %v1100
        %v1189 = vpop.f32.mrf.mxu0
        %v1190 = vadd.f32 %v1105, %v1189
        %v1191 = vpop.f32.mrf.mxu0
        %v1192 = vpop.f32.mrf.mxu0
        %v1193 = vpop.f32.mrf.mxu0
        %1194 = vdwg.mxu0
        %v1195 = vmul.f32 %v1190, %v1190
        %1196 = vadd.xlane.f32.xlu0 %v1195
        %v1197 = vpop.xlane.xlu0 %1196
        %v1198 = vadd.f32 %v1197, 1e-12
        %v1199 = vrsqrt.pop %v1198
        %v1200 = vmul.f32 %v1190, %v1199
        %1201 = vmatprep.subr.bf16.mxu0 0
        %1202 = vmatpush1.bf16.msra.mxu0 0
        %1203 = vmatprep.subr.bf16.mxu0 0
        %1204 = vmatpush1.bf16.msra.mxu0 0
        %1205 = vmatprep.subr.bf16.mxu0 0
        %1206 = vmatpush1.bf16.msra.mxu0 0
        %1207 = vmatprep.subr.bf16.mxu0 0
        %1208 = vmatpush1.bf16.msra.mxu0 0
        %1209 = vmatprep.subr.bf16.mxu0 0
        %1210 = vmatpush1.bf16.msra.mxu0 0
        %1211 = vmatprep.subr.bf16.mxu0 0
        %1212 = vmatpush1.bf16.msra.mxu0 0
        %1213 = vmatprep.subr.bf16.mxu0 0
        %1214 = vmatpush1.bf16.msra.mxu0 0
        %1215 = vmatprep.subr.bf16.mxu0 0
        %1216 = vmatpush1.bf16.msra.mxu0 %v1057
        %1217 = vmatprep.subr.bf16.mxu0 0
        %1218 = vmatpush2.bf16.msra.mxu0 0
        %1219 = vmatprep.subr.bf16.mxu0 0
        %1220 = vmatpush2.bf16.msra.mxu0 0
        %1221 = vmatprep.subr.bf16.mxu0 0
        %1222 = vmatpush2.bf16.msra.mxu0 0
        %1223 = vmatprep.subr.bf16.mxu0 0
        %1224 = vmatpush2.bf16.msra.mxu0 0
        %1225 = vmatprep.subr.bf16.mxu0 0
        %1226 = vmatpush2.bf16.msra.mxu0 0
        %1227 = vmatprep.subr.bf16.mxu0 0
        %1228 = vmatpush2.bf16.msra.mxu0 0
        %1229 = vmatprep.subr.bf16.mxu0 0
        %1230 = vmatpush2.bf16.msra.mxu0 0
        %1231 = vmatprep.subr.bf16.mxu0 0
        %1232 = vmatpush2.bf16.msra.mxu0 0
        %1233 = vmatprep.mubr.bf16.mxu0 0
        %1234 = vmatmul.mubr.bf16.gmra.mxu0 %v960
        %v1235 = vpop.f32.mrf.mxu0
        %v1236 = vadd.f32 %v1054, %v1235
        %v1237 = vpop.f32.mrf.mxu0
        %v1238 = vpop.f32.mrf.mxu0
        %v1239 = vpop.f32.mrf.mxu0
        %1240 = vdwg.mxu0
        %v1241 = vmax.f32 %v1236, 0.0
        %v1242 = vpack.c.bf16 %v1241, %v1241
        %1243 = vmatprep.subr.bf16.mxu0 0
        %1244 = vmatpush1.bf16.msra.mxu0 %v1146
        %1245 = vmatprep.subr.bf16.mxu0 0
        %1246 = vmatpush1.bf16.msra.mxu0 %v1145
        %1247 = vmatprep.subr.bf16.mxu0 0
        %1248 = vmatpush1.bf16.msra.mxu0 %v1144
        %1249 = vmatprep.subr.bf16.mxu0 0
        %1250 = vmatpush1.bf16.msra.mxu0 %v1143
        %1251 = vmatprep.subr.bf16.mxu0 0
        %1252 = vmatpush1.bf16.msra.mxu0 %v1142
        %1253 = vmatprep.subr.bf16.mxu0 0
        %1254 = vmatpush1.bf16.msra.mxu0 %v1141
        %1255 = vmatprep.subr.bf16.mxu0 0
        %1256 = vmatpush1.bf16.msra.mxu0 %v1140
        %1257 = vmatprep.subr.bf16.mxu0 0
        %1258 = vmatpush1.bf16.msra.mxu0 %v1139
        %1259 = vmatprep.subr.bf16.mxu0 0
        %1260 = vmatpush2.bf16.msra.mxu0 0
        %1261 = vmatprep.subr.bf16.mxu0 0
        %1262 = vmatpush2.bf16.msra.mxu0 0
        %1263 = vmatprep.subr.bf16.mxu0 0
        %1264 = vmatpush2.bf16.msra.mxu0 0
        %1265 = vmatprep.subr.bf16.mxu0 0
        %1266 = vmatpush2.bf16.msra.mxu0 0
        %1267 = vmatprep.subr.bf16.mxu0 0
        %1268 = vmatpush2.bf16.msra.mxu0 0
        %1269 = vmatprep.subr.bf16.mxu0 0
        %1270 = vmatpush2.bf16.msra.mxu0 0
        %1271 = vmatprep.subr.bf16.mxu0 0
        %1272 = vmatpush2.bf16.msra.mxu0 0
        %1273 = vmatprep.subr.bf16.mxu0 0
        %1274 = vmatpush2.bf16.msra.mxu0 0
        %1275 = vmatprep.mubr.bf16.mxu0 0
        %1276 = vmatmul.mubr.bf16.gmra.mxu0 %v1242
        %v1277 = vpop.f32.mrf.mxu0
        %v1278 = vadd.f32 %v1105, %v1277
        %v1279 = vpop.f32.mrf.mxu0
        %v1280 = vpop.f32.mrf.mxu0
        %v1281 = vpop.f32.mrf.mxu0
        %1282 = vdwg.mxu0
        %v1283 = vmul.f32 %v1278, %v1278
        %1284 = vadd.xlane.f32.xlu0 %v1283
        %v1285 = vpop.xlane.xlu0 %1284
        %v1286 = vadd.f32 %v1285, 1e-12
        %v1287 = vrsqrt.pop %v1286
        %v1288 = vmul.f32 %v1278, %v1287
        %s1289 = smul.u32 %s32, 8
        %s1290 = scalar_lea.vmem [#allocation2], %s1289
        %1291 = vst [vmem:[%s1290] sm:$0xff] %v902
        %s1292 = sadd.s32 %s1289, 16
        %s1293 = scalar_lea.vmem [#allocation2], %s1292
        %1294 = vst [vmem:[%s1293] sm:$0xff] %v1049
        %v1295 = vmul.f32 %v902, %v1049
        %1296 = vadd.xlane.f32.xlu0 %v1295
        %v1297 = vpop.xlane.xlu0 %1296
        %v1298 = vadd.f32 %v1288, %v1200
        %v1299 = vmul.f32 %v902, %v1298
        %1300 = vadd.xlane.f32.xlu0 %v1299
        %v1301 = vpop.xlane.xlu0 %1300
        %v1302 = vmul.f32 %v1049, %v1298
        %1303 = vadd.xlane.f32.xlu0 %v1302
        %v1304 = vpop.xlane.xlu0 %1303
        %s1305 = scalar_lea.vmem [#allocation4], %s1289
        %vm1306 = vcmask 7168
        %1307 = vst.msk [vmem:[%s1305] sm:$0xff] %vm1306, %v1297
        %s1308 = scalar_lea.vmem [#allocation4], %s1292
        %1309 = vst.msk [vmem:[%s1308] sm:$0xff] %vm1306, %v1297
        %s1310 = scalar_lea.vmem [#allocation3], %s1289
        %1311 = vst.msk [vmem:[%s1310] sm:$0xff] %vm1306, %v1301
        %s1312 = scalar_lea.vmem [#allocation3], %s1292
        %1313 = vst.msk [vmem:[%s1312] sm:$0xff] %vm1306, %v1304
        %p1314 = scmp.eq.s32.totalorder %s32, 1
        // Predicated region
        $region77: #{tpu_custom_call.1} parent=59 // pred_check
          %p1315 = pneg %p1314
        $region78: #{tpu_custom_call.1} parent=59 // pred_check_branch
          %1317 = sbr.rel (%p1315) target = $region80
        $region79: #{tpu_custom_call.1} parent=59 // pred_region
          %v1318 = vld [vmem:[#allocation2] sm:$0xff]
          %v1319 = vld [vmem:[#allocation2 + $0x8] sm:$0xff]
          %v1320 = vld [vmem:[#allocation2 + $0x10] sm:$0xff]
          %v1321 = vld [vmem:[#allocation2 + $0x18] sm:$0xff]
          %v1322 = vpack.c.bf16 %v1319, %v1318
          %v1323 = vpack.c.bf16 %v1321, %v1320
          %1324 = vmatprep.subr.bf16.mxu0 0
          %1325 = vmatpush1.bf16.xpose.msra.mxu0 0
          %1326 = vmatprep.subr.bf16.mxu0 0
          %1327 = vmatpush1.bf16.xpose.msra.mxu0 0
          %1328 = vmatprep.subr.bf16.mxu0 0
          %1329 = vmatpush1.bf16.xpose.msra.mxu0 0
          %1330 = vmatprep.subr.bf16.mxu0 0
          %1331 = vmatpush1.bf16.xpose.msra.mxu0 0
          %1332 = vmatprep.subr.bf16.mxu0 0
          %1333 = vmatpush1.bf16.xpose.msra.mxu0 0
          %1334 = vmatprep.subr.bf16.mxu0 0
          %1335 = vmatpush1.bf16.xpose.msra.mxu0 0
          %1336 = vmatprep.subr.bf16.mxu0 0
          %1337 = vmatpush1.bf16.xpose.msra.mxu0 %v1323
          %1338 = vmatprep.subr.bf16.mxu0 0
          %1339 = vmatpush1.bf16.xpose.msra.mxu0 %v1322
          %1340 = vmatprep.subr.bf16.mxu0 0
          %1341 = vmatpush2.bf16.xpose.msra.mxu0 0
          %1342 = vmatprep.subr.bf16.mxu0 0
          %1343 = vmatpush2.bf16.xpose.msra.mxu0 0
          %1344 = vmatprep.subr.bf16.mxu0 0
          %1345 = vmatpush2.bf16.xpose.msra.mxu0 0
          %1346 = vmatprep.subr.bf16.mxu0 0
          %1347 = vmatpush2.bf16.xpose.msra.mxu0 0
          %1348 = vmatprep.subr.bf16.mxu0 0
          %1349 = vmatpush2.bf16.xpose.msra.mxu0 0
          %1350 = vmatprep.subr.bf16.mxu0 0
          %1351 = vmatpush2.bf16.xpose.msra.mxu0 0
          %1352 = vmatprep.subr.bf16.mxu0 0
          %1353 = vmatpush2.bf16.xpose.msra.mxu0 0
          %1354 = vmatprep.subr.bf16.mxu0 0
          %1355 = vmatpush2.bf16.xpose.msra.mxu0 0
          %1356 = vmatprep.mubr.bf16.mxu0 0
          %1357 = vmatmul.mubr.bf16.gmra.mxu0 %v1322
          %v1358 = vpop.f32.mrf.mxu0
          %v1359 = vadd.f32 0.0, %v1358
          %v1360 = vpop.f32.mrf.mxu0
          %v1361 = vpop.f32.mrf.mxu0
          %v1362 = vadd.f32 0.0, %v1361
          %v1363 = vpop.f32.mrf.mxu0
          %1364 = vmatprep.mubr.bf16.mxu0 0
          %1365 = vmatmul.mubr.bf16.gmra.mxu0 %v1323
          %v1366 = vpop.f32.mrf.mxu0
          %v1367 = vadd.f32 0.0, %v1366
          %v1368 = vpop.f32.mrf.mxu0
          %v1369 = vpop.f32.mrf.mxu0
          %v1370 = vadd.f32 0.0, %v1369
          %v1371 = vpop.f32.mrf.mxu0
          %1372 = vdwg.mxu0
          %v1373 = vmul.f32 %v1359, 2.0
          %v1374 = vmul.f32 %v1362, 2.0
          %v1375 = vmul.f32 %v1367, 2.0
          %v1376 = vmul.f32 %v1370, 2.0
          %v1377 = vld [vmem:[#allocation4] sm:$0xff]
          %v1378 = vld [vmem:[#allocation4 + $0x8] sm:$0xff]
          %v1379 = vld [vmem:[#allocation4 + $0x10] sm:$0xff]
          %v1380 = vld [vmem:[#allocation4 + $0x18] sm:$0xff]
          %v1381 = vmul.f32 %v1377, 2.0
          %v1382 = vmul.f32 %v1378, 2.0
          %v1383 = vmul.f32 %v1379, 2.0
          %v1384 = vmul.f32 %v1380, 2.0
          %v1385 = vld [vmem:[#allocation3] sm:$0xff]
          %v1386 = vld [vmem:[#allocation3 + $0x8] sm:$0xff]
          %v1387 = vld [vmem:[#allocation3 + $0x10] sm:$0xff]
          %v1388 = vld [vmem:[#allocation3 + $0x18] sm:$0xff]
          %v1389 = vmul.f32 %v1385, 2.0
          %v1390 = vmul.f32 %v1386, 2.0
          %v1391 = vmul.f32 %v1387, 2.0
          %v1392 = vmul.f32 %v1388, 2.0
          %v1393 = vadd.f32 %v1389, %v1381
          %v1394 = vadd.f32 %v1390, %v1382
          %v1395 = vadd.f32 %v1391, %v1383
          %v1396 = vadd.f32 %v1392, %v1384
          %v1397 = vmul.f32 %v1393, 0.33333334
          %v1398 = vmul.f32 %v1394, 0.33333334
          %v1399 = vmul.f32 %v1395, 0.33333334
          %v1400 = vmul.f32 %v1396, 0.33333334
          %v1401 = vlaneseq
          %v1402 = vshrl.u32 %v1401, 7
          %v1403 = vadd.s32 %v1402, 8
          %v1404 = vadd.s32 %v1402, 16
          %v1405 = vadd.s32 %v1402, 24
          %vm1406 = vcmp.eq.s32.totalorder %v705, %v1402
          %vm1407 = vcmp.eq.s32.totalorder %v705, %v1403
          %vm1408 = vcmp.eq.s32.totalorder %v705, %v1404
          %vm1409 = vcmp.eq.s32.totalorder %v705, %v1405
          %v1410 = vsel %vm1406, 1, 0
          %v1411 = vsel %vm1407, 1, 0
          %v1412 = vsel %vm1408, 1, 0
          %v1413 = vsel %vm1409, 1, 0
          %v1414 = vcvt.s32.f32 %v1410
          %v1415 = vcvt.s32.f32 %v1411
          %v1416 = vcvt.s32.f32 %v1412
          %v1417 = vcvt.s32.f32 %v1413
          %v1418 = vadd.s32 %v1402, 1
          %v1419 = vadd.s32 %v1403, 1
          %v1420 = vadd.s32 %v1404, 1
          %v1421 = vadd.s32 %v1405, 1
          %vm1422 = vcmp.eq.s32.totalorder %v705, %v1418
          %vm1423 = vcmp.eq.s32.totalorder %v705, %v1419
          %vm1424 = vcmp.eq.s32.totalorder %v705, %v1420
          %vm1425 = vcmp.eq.s32.totalorder %v705, %v1421
          %v1426 = vsel %vm1422, 1, 0
          %v1427 = vsel %vm1423, 1, 0
          %v1428 = vsel %vm1424, 1, 0
          %v1429 = vsel %vm1425, 1, 0
          %v1430 = vcvt.s32.f32 %v1426
          %v1431 = vcvt.s32.f32 %v1427
          %v1432 = vcvt.s32.f32 %v1428
          %v1433 = vcvt.s32.f32 %v1429
          %v1434 = vsub.s32 %v1402, 1
          %v1435 = vsub.s32 %v1403, 1
          %v1436 = vsub.s32 %v1404, 1
          %v1437 = vsub.s32 %v1405, 1
          %vm1438 = vcmp.eq.s32.totalorder %v705, %v1434
          %vm1439 = vcmp.eq.s32.totalorder %v705, %v1435
          %vm1440 = vcmp.eq.s32.totalorder %v705, %v1436
          %vm1441 = vcmp.eq.s32.totalorder %v705, %v1437
          %v1442 = vsel %vm1438, 1, 0
          %v1443 = vsel %vm1439, 1, 0
          %v1444 = vsel %vm1440, 1, 0
          %v1445 = vsel %vm1441, 1, 0
          %v1446 = vcvt.s32.f32 %v1442
          %v1447 = vcvt.s32.f32 %v1443
          %v1448 = vcvt.s32.f32 %v1444
          %v1449 = vcvt.s32.f32 %v1445
          %vm1450 = vcmask 261120
          %v1452 = vsel %vm1450, %v1373, 0
          %v1455 = vsel %vm1450, %v1374, 0
          %v1458 = vsel %vm1450, %v1375, 0
          %v1461 = vsel %vm1450, %v1376, 0
          %1463 = vmatprep.subr.mxu0 0.0
          %1464 = vmatpush1.msra.mxu0 0.0
          %1465 = vmatprep.subr.mxu0 0.0
          %1466 = vmatpush1.msra.mxu0 0.0
          %1467 = vmatprep.subr.mxu0 0.0
          %1468 = vmatpush1.msra.mxu0 0.0
          %1469 = vmatprep.subr.mxu0 0.0
          %1470 = vmatpush1.msra.mxu0 0.0
          %1471 = vmatprep.subr.mxu0 0.0
          %1472 = vmatpush1.msra.mxu0 0.0
          %1473 = vmatprep.subr.mxu0 0.0
          %1474 = vmatpush1.msra.mxu0 0.0
          %1475 = vmatprep.subr.mxu0 0.0
          %1476 = vmatpush1.msra.mxu0 0.0
          %1477 = vmatprep.subr.mxu0 0.0
          %1478 = vmatpush1.msra.mxu0 0.0
          %1479 = vmatprep.subr.mxu0 0.0
          %1480 = vmatpush1.msra.mxu0 0.0
          %1481 = vmatprep.subr.mxu0 0.0
          %1482 = vmatpush1.msra.mxu0 0.0
          %1483 = vmatprep.subr.mxu0 0.0
          %1484 = vmatpush1.msra.mxu0 0.0
          %1485 = vmatprep.subr.mxu0 0.0
          %1486 = vmatpush1.msra.mxu0 0.0
          %1487 = vmatprep.subr.mxu0 0.0
          %1488 = vmatpush1.msra.mxu0 %v1417
          %1489 = vmatprep.subr.mxu0 0.0
          %1490 = vmatpush1.msra.mxu0 %v1416
          %1491 = vmatprep.subr.mxu0 0.0
          %1492 = vmatpush1.msra.mxu0 %v1415
          %1493 = vmatprep.subr.mxu0 0.0
          %1494 = vmatpush1.msra.mxu0 %v1414
          %1495 = vmatprep.subr.mxu0 0.0
          %1496 = vmatpush2.msra.mxu0 0.0
          %1497 = vmatprep.subr.mxu0 0.0
          %1498 = vmatpush2.msra.mxu0 0.0
          %1499 = vmatprep.subr.mxu0 0.0
          %1500 = vmatpush2.msra.mxu0 0.0
          %1501 = vmatprep.subr.mxu0 0.0
          %1502 = vmatpush2.msra.mxu0 0.0
          %1503 = vmatprep.subr.mxu0 0.0
          %1504 = vmatpush2.msra.mxu0 0.0
          %1505 = vmatprep.subr.mxu0 0.0
          %1506 = vmatpush2.msra.mxu0 0.0
          %1507 = vmatprep.subr.mxu0 0.0
          %1508 = vmatpush2.msra.mxu0 0.0
          %1509 = vmatprep.subr.mxu0 0.0
          %1510 = vmatpush2.msra.mxu0 0.0
          %1511 = vmatprep.subr.mxu0 0.0
          %1512 = vmatpush2.msra.mxu0 0.0
          %1513 = vmatprep.subr.mxu0 0.0
          %1514 = vmatpush2.msra.mxu0 0.0
          %1515 = vmatprep.subr.mxu0 0.0
          %1516 = vmatpush2.msra.mxu0 0.0
          %1517 = vmatprep.subr.mxu0 0.0
          %1518 = vmatpush2.msra.mxu0 0.0
          %1519 = vmatprep.subr.mxu0 0.0
          %1520 = vmatpush2.msra.mxu0 0.0
          %1521 = vmatprep.subr.mxu0 0.0
          %1522 = vmatpush2.msra.mxu0 0.0
          %1523 = vmatprep.subr.mxu0 0.0
          %1524 = vmatpush2.msra.mxu0 0.0
          %1525 = vmatprep.subr.mxu0 0.0
          %1526 = vmatpush2.msra.mxu0 0.0
          %1527 = vmatprep.mubr.f32.mxu0 0.0
          %1528 = vmatmul.mubr.f32.gmra.mxu0 %v1452
          %v1529 = vpop.f32.mrf.mxu0
          %v1530 = vadd.f32 0.0, %v1529
          %v1531 = vpop.f32.mrf.mxu0
          %1532 = vmatprep.mubr.f32.mxu0 0.0
          %1533 = vmatmul.mubr.f32.gmra.mxu0 %v1455
          %v1534 = vpop.f32.mrf.mxu0
          %v1535 = vadd.f32 0.0, %v1534
          %v1536 = vpop.f32.mrf.mxu0
          %1537 = vmatprep.mubr.f32.mxu0 0.0
          %1538 = vmatmul.mubr.f32.gmra.mxu0 %v1458
          %v1539 = vpop.f32.mrf.mxu0
          %v1540 = vadd.f32 0.0, %v1539
          %v1541 = vpop.f32.mrf.mxu0
          %1542 = vmatprep.mubr.f32.mxu0 0.0
          %1543 = vmatmul.mubr.f32.gmra.mxu0 %v1461
          %v1544 = vpop.f32.mrf.mxu0
          %v1545 = vadd.f32 0.0, %v1544
          %v1546 = vpop.f32.mrf.mxu0
          %1547 = vdwg.mxu0
          %1548 = vmatprep.subr.mxu0 0.0
          %1549 = vmatpush1.msra.mxu0 0.0
          %1550 = vmatprep.subr.mxu0 0.0
          %1551 = vmatpush1.msra.mxu0 0.0
          %1552 = vmatprep.subr.mxu0 0.0
          %1553 = vmatpush1.msra.mxu0 0.0
          %1554 = vmatprep.subr.mxu0 0.0
          %1555 = vmatpush1.msra.mxu0 0.0
          %1556 = vmatprep.subr.mxu0 0.0
          %1557 = vmatpush1.msra.mxu0 0.0
          %1558 = vmatprep.subr.mxu0 0.0
          %1559 = vmatpush1.msra.mxu0 0.0
          %1560 = vmatprep.subr.mxu0 0.0
          %1561 = vmatpush1.msra.mxu0 0.0
          %1562 = vmatprep.subr.mxu0 0.0
          %1563 = vmatpush1.msra.mxu0 0.0
          %1564 = vmatprep.subr.mxu0 0.0
          %1565 = vmatpush1.msra.mxu0 0.0
          %1566 = vmatprep.subr.mxu0 0.0
          %1567 = vmatpush1.msra.mxu0 0.0
          %1568 = vmatprep.subr.mxu0 0.0
          %1569 = vmatpush1.msra.mxu0 0.0
          %1570 = vmatprep.subr.mxu0 0.0
          %1571 = vmatpush1.msra.mxu0 0.0
          %1572 = vmatprep.subr.mxu0 0.0
          %1573 = vmatpush1.msra.mxu0 %v1433
          %1574 = vmatprep.subr.mxu0 0.0
          %1575 = vmatpush1.msra.mxu0 %v1432
          %1576 = vmatprep.subr.mxu0 0.0
          %1577 = vmatpush1.msra.mxu0 %v1431
          %1578 = vmatprep.subr.mxu0 0.0
          %1579 = vmatpush1.msra.mxu0 %v1430
          %1580 = vmatprep.subr.mxu0 0.0
          %1581 = vmatpush2.msra.mxu0 0.0
          %1582 = vmatprep.subr.mxu0 0.0
          %1583 = vmatpush2.msra.mxu0 0.0
          %1584 = vmatprep.subr.mxu0 0.0
          %1585 = vmatpush2.msra.mxu0 0.0
          %1586 = vmatprep.subr.mxu0 0.0
          %1587 = vmatpush2.msra.mxu0 0.0
          %1588 = vmatprep.subr.mxu0 0.0
          %1589 = vmatpush2.msra.mxu0 0.0
          %1590 = vmatprep.subr.mxu0 0.0
          %1591 = vmatpush2.msra.mxu0 0.0
          %1592 = vmatprep.subr.mxu0 0.0
          %1593 = vmatpush2.msra.mxu0 0.0
          %1594 = vmatprep.subr.mxu0 0.0
          %1595 = vmatpush2.msra.mxu0 0.0
          %1596 = vmatprep.subr.mxu0 0.0
          %1597 = vmatpush2.msra.mxu0 0.0
          %1598 = vmatprep.subr.mxu0 0.0
          %1599 = vmatpush2.msra.mxu0 0.0
          %1600 = vmatprep.subr.mxu0 0.0
          %1601 = vmatpush2.msra.mxu0 0.0
          %1602 = vmatprep.subr.mxu0 0.0
          %1603 = vmatpush2.msra.mxu0 0.0
          %1604 = vmatprep.subr.mxu0 0.0
          %1605 = vmatpush2.msra.mxu0 0.0
          %1606 = vmatprep.subr.mxu0 0.0
          %1607 = vmatpush2.msra.mxu0 0.0
          %1608 = vmatprep.subr.mxu0 0.0
          %1609 = vmatpush2.msra.mxu0 0.0
          %1610 = vmatprep.subr.mxu0 0.0
          %1611 = vmatpush2.msra.mxu0 0.0
          %1612 = vmatprep.mubr.f32.mxu0 0.0
          %1613 = vmatmul.mubr.f32.gmra.mxu0 %v1452
          %v1614 = vpop.f32.mrf.mxu0
          %v1615 = vadd.f32 0.0, %v1614
          %v1616 = vpop.f32.mrf.mxu0
          %1617 = vmatprep.mubr.f32.mxu0 0.0
          %1618 = vmatmul.mubr.f32.gmra.mxu0 %v1455
          %v1619 = vpop.f32.mrf.mxu0
          %v1620 = vadd.f32 0.0, %v1619
          %v1621 = vpop.f32.mrf.mxu0
          %1622 = vmatprep.mubr.f32.mxu0 0.0
          %1623 = vmatmul.mubr.f32.gmra.mxu0 %v1458
          %v1624 = vpop.f32.mrf.mxu0
          %v1625 = vadd.f32 0.0, %v1624
          %v1626 = vpop.f32.mrf.mxu0
          %1627 = vmatprep.mubr.f32.mxu0 0.0
          %1628 = vmatmul.mubr.f32.gmra.mxu0 %v1461
          %v1629 = vpop.f32.mrf.mxu0
          %v1630 = vadd.f32 0.0, %v1629
          %v1631 = vpop.f32.mrf.mxu0
          %1632 = vdwg.mxu0
          %1633 = vmatprep.subr.mxu0 0.0
          %1634 = vmatpush1.msra.mxu0 0.0
          %1635 = vmatprep.subr.mxu0 0.0
          %1636 = vmatpush1.msra.mxu0 0.0
          %1637 = vmatprep.subr.mxu0 0.0
          %1638 = vmatpush1.msra.mxu0 0.0
          %1639 = vmatprep.subr.mxu0 0.0
          %1640 = vmatpush1.msra.mxu0 0.0
          %1641 = vmatprep.subr.mxu0 0.0
          %1642 = vmatpush1.msra.mxu0 0.0
          %1643 = vmatprep.subr.mxu0 0.0
          %1644 = vmatpush1.msra.mxu0 0.0
          %1645 = vmatprep.subr.mxu0 0.0
          %1646 = vmatpush1.msra.mxu0 0.0
          %1647 = vmatprep.subr.mxu0 0.0
          %1648 = vmatpush1.msra.mxu0 0.0
          %1649 = vmatprep.subr.mxu0 0.0
          %1650 = vmatpush1.msra.mxu0 0.0
          %1651 = vmatprep.subr.mxu0 0.0
          %1652 = vmatpush1.msra.mxu0 0.0
          %1653 = vmatprep.subr.mxu0 0.0
          %1654 = vmatpush1.msra.mxu0 0.0
          %1655 = vmatprep.subr.mxu0 0.0
          %1656 = vmatpush1.msra.mxu0 0.0
          %1657 = vmatprep.subr.mxu0 0.0
          %1658 = vmatpush1.msra.mxu0 %v1449
          %1659 = vmatprep.subr.mxu0 0.0
          %1660 = vmatpush1.msra.mxu0 %v1448
          %1661 = vmatprep.subr.mxu0 0.0
          %1662 = vmatpush1.msra.mxu0 %v1447
          %1663 = vmatprep.subr.mxu0 0.0
          %1664 = vmatpush1.msra.mxu0 %v1446
          %1665 = vmatprep.subr.mxu0 0.0
          %1666 = vmatpush2.msra.mxu0 0.0
          %1667 = vmatprep.subr.mxu0 0.0
          %1668 = vmatpush2.msra.mxu0 0.0
          %1669 = vmatprep.subr.mxu0 0.0
          %1670 = vmatpush2.msra.mxu0 0.0
          %1671 = vmatprep.subr.mxu0 0.0
          %1672 = vmatpush2.msra.mxu0 0.0
          %1673 = vmatprep.subr.mxu0 0.0
          %1674 = vmatpush2.msra.mxu0 0.0
          %1675 = vmatprep.subr.mxu0 0.0
          %1676 = vmatpush2.msra.mxu0 0.0
          %1677 = vmatprep.subr.mxu0 0.0
          %1678 = vmatpush2.msra.mxu0 0.0
          %1679 = vmatprep.subr.mxu0 0.0
          %1680 = vmatpush2.msra.mxu0 0.0
          %1681 = vmatprep.subr.mxu0 0.0
          %1682 = vmatpush2.msra.mxu0 0.0
          %1683 = vmatprep.subr.mxu0 0.0
          %1684 = vmatpush2.msra.mxu0 0.0
          %1685 = vmatprep.subr.mxu0 0.0
          %1686 = vmatpush2.msra.mxu0 0.0
          %1687 = vmatprep.subr.mxu0 0.0
          %1688 = vmatpush2.msra.mxu0 0.0
          %1689 = vmatprep.subr.mxu0 0.0
          %1690 = vmatpush2.msra.mxu0 0.0
          %1691 = vmatprep.subr.mxu0 0.0
          %1692 = vmatpush2.msra.mxu0 0.0
          %1693 = vmatprep.subr.mxu0 0.0
          %1694 = vmatpush2.msra.mxu0 0.0
          %1695 = vmatprep.subr.mxu0 0.0
          %1696 = vmatpush2.msra.mxu0 0.0
          %1697 = vmatprep.mubr.f32.mxu0 0.0
          %1698 = vmatmul.mubr.f32.gmra.mxu0 %v1452
          %v1699 = vpop.f32.mrf.mxu0
          %v1700 = vadd.f32 0.0, %v1699
          %v1701 = vpop.f32.mrf.mxu0
          %1702 = vmatprep.mubr.f32.mxu0 0.0
          %1703 = vmatmul.mubr.f32.gmra.mxu0 %v1455
          %v1704 = vpop.f32.mrf.mxu0
          %v1705 = vadd.f32 0.0, %v1704
          %v1706 = vpop.f32.mrf.mxu0
          %1707 = vmatprep.mubr.f32.mxu0 0.0
          %1708 = vmatmul.mubr.f32.gmra.mxu0 %v1458
          %v1709 = vpop.f32.mrf.mxu0
          %v1710 = vadd.f32 0.0, %v1709
          %v1711 = vpop.f32.mrf.mxu0
          %1712 = vmatprep.mubr.f32.mxu0 0.0
          %1713 = vmatmul.mubr.f32.gmra.mxu0 %v1461
          %v1714 = vpop.f32.mrf.mxu0
          %v1715 = vadd.f32 0.0, %v1714
          %v1716 = vpop.f32.mrf.mxu0
          %1717 = vdwg.mxu0
          %vm1718 = vcmp.lt.s32.totalorder %v1402, 16
          %vm1719 = vcmp.lt.s32.totalorder %v1403, 16
          %vm1720 = vcmp.lt.s32.totalorder %v1404, 16
          %vm1721 = vcmp.lt.s32.totalorder %v1405, 16
          %v1722 = vsub.s32 %v1402, 16
          %v1723 = vsub.s32 %v1403, 16
          %v1724 = vsub.s32 %v1405, 16
          %v1725 = vsel %vm1718, %v1402, %v1722
          %v1726 = vsel %vm1719, %v1403, %v1723
          %v1727 = vsel %vm1720, %v1404, %v1402
          %v1728 = vsel %vm1721, %v1405, %v1724
          %v1729 = vsub.s32 %v705, 1
          %vm1730 = vcmp.lt.s32.totalorder %v1729, %v1725
          %vm1731 = vcmp.lt.s32.totalorder %v1729, %v1726
          %vm1732 = vcmp.lt.s32.totalorder %v1729, %v1727
          %vm1733 = vcmp.lt.s32.totalorder %v1729, %v1728
          %v1734 = vadd.s32 %v1725, 15
          %v1735 = vadd.s32 %v1726, 15
          %v1736 = vadd.s32 %v1727, 15
          %v1737 = vadd.s32 %v1728, 15
          %vm1738 = vcmp.lt.s32.totalorder %v1729, %v1734
          %vm1739 = vcmp.lt.s32.totalorder %v1729, %v1735
          %vm1740 = vcmp.lt.s32.totalorder %v1729, %v1736
          %vm1741 = vcmp.lt.s32.totalorder %v1729, %v1737
          %v1742 = vsel %vm1738, %v1530, %v1700
          %v1743 = vsel %vm1739, %v1535, %v1705
          %v1744 = vsel %vm1740, %v1540, %v1710
          %v1745 = vsel %vm1741, %v1545, %v1715
          %v1746 = vsel %vm1730, %v1615, %v1742
          %v1747 = vsel %vm1731, %v1620, %v1743
          %v1748 = vsel %vm1732, %v1625, %v1744
          %v1749 = vsel %vm1733, %v1630, %v1745
          %vm1750 = vcmp.eq.s32.totalorder %v705, 0
          %1752 = vset.pattern.permute.xlu0 0
          %1753 = vperm.xlu0 %1752, %v1397
          %v1754 = vpop.permute.xlu0 %1753
          %1757 = vset.pattern.permute.xlu0 0
          %1758 = vperm.xlu0 %1757, %v1398
          %v1759 = vpop.permute.xlu0 %1758
          %1762 = vset.pattern.permute.xlu0 0
          %1763 = vperm.xlu0 %1762, %v1399
          %v1764 = vpop.permute.xlu0 %1763
          %1767 = vset.pattern.permute.xlu0 0
          %1768 = vperm.xlu0 %1767, %v1400
          %v1769 = vpop.permute.xlu0 %1768
          %v1771 = vsel %vm1750, %v1754, %v1746
          %v1772 = vsel %vm1750, %v1759, %v1747
          %v1773 = vsel %vm1750, %v1764, %v1748
          %v1774 = vsel %vm1750, %v1769, %v1749
          %vm1775 = vcmask 252928
          %1776 = vst.msk [vmem:[#allocation13] sm:$0xff] %vm1775, %v1771
          %1777 = vst.msk [vmem:[#allocation13 + $0x8] sm:$0xff] %vm1775, %v1772
          %1778 = vst.msk [vmem:[#allocation13 + $0x10] sm:$0xff] %vm1775, %v1773
          %1779 = vst.msk [vmem:[#allocation13 + $0x18] sm:$0xff] %vm1775, %v1774
          %1781 = vset.pattern.permute.xlu0 0
          %1782 = vperm.xlu0 %1781, %v1381
          %v1783 = vpop.permute.xlu0 %1782
          %1786 = vset.pattern.permute.xlu0 0
          %1787 = vperm.xlu0 %1786, %v1382
          %v1788 = vpop.permute.xlu0 %1787
          %1791 = vset.pattern.permute.xlu0 0
          %1792 = vperm.xlu0 %1791, %v1383
          %v1793 = vpop.permute.xlu0 %1792
          %1796 = vset.pattern.permute.xlu0 0
          %1797 = vperm.xlu0 %1796, %v1384
          %v1798 = vpop.permute.xlu0 %1797
          %v1800 = vsel %vm1750, %v1783, %v1746
          %v1801 = vsel %vm1750, %v1788, %v1747
          %v1802 = vsel %vm1750, %v1793, %v1748
          %v1803 = vsel %vm1750, %v1798, %v1749
          %1804 = vst.msk [vmem:[#allocation14] sm:$0xff] %vm1775, %v1800
          %1805 = vst.msk [vmem:[#allocation14 + $0x8] sm:$0xff] %vm1775, %v1801
          %1806 = vst.msk [vmem:[#allocation14 + $0x10] sm:$0xff] %vm1775, %v1802
          %1807 = vst.msk [vmem:[#allocation14 + $0x18] sm:$0xff] %vm1775, %v1803
        $region80: #{tpu_custom_call.1} parent=59 // pred_fallthru
          _
        // Predicated region
        $region81: #{tpu_custom_call.1} parent=59 // pred_check
          %p1808 = pneg %p265
        $region82: #{tpu_custom_call.1} parent=59 // pred_check_branch
          %1810 = sbr.rel (%p1808) target = $region84
        $region83: #{tpu_custom_call.1} parent=59 // pred_region
          %s1812 = ssub.s32 512, 512
          %1813 = vsyncadd [#allocation7], %s1812
          %s1814 = sshll.u32 [#allocation13], 4
          %s1815 = int_to_ptr.vmem [resolvable:$true] %s1814
          %1820 = dma.vmem_to_hbm [thread:$0]  %s1815, 512, %s10, [#allocation7], 128, 128, 8
        $region84: #{tpu_custom_call.1} parent=59 // pred_fallthru
          _
        // Predicated region
        $region85: #{tpu_custom_call.1} parent=59 // pred_check
          %p1821 = pneg %p286
        $region86: #{tpu_custom_call.1} parent=59 // pred_check_branch
          %1823 = sbr.rel (%p1821) target = $region88
        $region87: #{tpu_custom_call.1} parent=59 // pred_region
          %s1825 = ssub.s32 512, 512
          %1826 = vsyncadd [#allocation15], %s1825
          %s1827 = sshll.u32 [#allocation14], 4
          %s1828 = int_to_ptr.vmem [resolvable:$true] %s1827
          %1833 = dma.vmem_to_hbm [thread:$0]  %s1828, 512, %s11, [#allocation15], 128, 128, 8
        $region88: #{tpu_custom_call.1} parent=59 // pred_fallthru
          _
        // Predicated region
        $region89: #{tpu_custom_call.1} parent=59 // pred_check
          %p1834 = pneg %p265
        $region90: #{tpu_custom_call.1} parent=59 // pred_check_branch
          %1836 = sbr.rel (%p1834) target = $region92
        $region91: #{tpu_custom_call.1} parent=59 // pred_region
          %1837 = dma.done [#allocation7], 512
        $region92: #{tpu_custom_call.1} parent=59 // pred_fallthru
          _
        // Predicated region
        $region93: #{tpu_custom_call.1} parent=59 // pred_check
          %p1838 = pneg %p286
        $region94: #{tpu_custom_call.1} parent=59 // pred_check_branch
          %1840 = sbr.rel (%p1838) target = $region96
        $region95: #{tpu_custom_call.1} parent=59 // pred_region
          %1841 = dma.done [#allocation15], 512
        $region96: #{tpu_custom_call.1} parent=59 // pred_fallthru
          _
      $region60: #{tpu_custom_call.1} parent=5 // pred_fallthru
        _
      %p1842 = scmp.le.s32.totalorder 2, %s27
      // Predicated region
      $region97: #{tpu_custom_call.1} parent=5 // pred_check
        %p1843 = pneg %p1842
      $region98: #{tpu_custom_call.1} parent=5 // pred_check_branch
        %1845 = sbr.rel (%p1843) target = $region100
      $region99: #{tpu_custom_call.1} parent=5 // pred_region
        %s1846 = ssub.s32 %s27, 2
      $region100: #{tpu_custom_call.1} parent=5 // pred_fallthru
        _
    $region6: #{tpu_custom_call.1} parent=1 // loop_footer
      %s31 = sadd.s32 1, %s27
    $region7: #{tpu_custom_call.1} parent=1 // loop_footer_branch
      %26 = sbr.rel target = $region3
    $region8: #{tpu_custom_call.1} parent=1 // loop_exit
      _
    %1847 = vsyncpa [#allocation6], 1
    %s1848 = scalar_lea.sflag [#allocation6], 1
    %1849 = vsyncpa %s1848, 1
    %1850 = vsyncpa [#allocation9], 1
    %s1851 = scalar_lea.sflag [#allocation9], 1
    %1852 = vsyncpa %s1851, 1
    %1853 = vsyncpa [#allocation12], 1
    %1854 = vsyncpa [#allocation7], 1
    %s1855 = scalar_lea.sflag [#allocation7], 1
    %1856 = vsyncpa %s1855, 1
    %1857 = vsyncpa [#allocation15], 1

</llo_original>
